<compile_context>
chip_gen: v6e
topology: v6e:2x2x1
jax: 0.10.0
libtpu: 0.0.40
codegen_flags: <defaults>
</compile_context>

<pallas_src>
import jax
import jax.numpy as jnp
from jax.experimental import pallas as pl
from jax.experimental.pallas import tpu as pltpu

D = 28 * 28  # 784, from torch.nn.Linear(28*28, 28*28)


def linear_tanh_kernel(x_ref, w_ref, b_ref, o_ref):
    # x_ref: (TB, 784) f32
    # w_ref: (784_in, 784_out) bf16  -- pre-transposed once at model load
    # b_ref: (1, 784) f32
    # Plain NN matmul: y = x @ W_io, f32 accumulation on the MXU, no weight
    # relayout.  Bias broadcasts over the batch rows; tanh epilogue on EUP.
    x = x_ref[...].astype(jnp.bfloat16)
    y = jnp.dot(x, w_ref[...], preferred_element_type=jnp.float32)
    y = y + b_ref[...]
    o_ref[...] = jnp.tanh(y).astype(o_ref.dtype)


def linear_tanh(x, w_io, b, *, max_batch_tile=512):
    """x: (B, 784) f32; w_io: (784_in, 784_out) bf16; b: (784,) f32."""
    if w_io.dtype != jnp.bfloat16:
        raise ValueError(
            f"weight must be bf16 (got {w_io.dtype}); an f32 weight silently "
            "doubles the dominant HBM traffic of this kernel.")
    B, d_in = x.shape
    d_out = w_io.shape[1]
    assert w_io.shape[0] == d_in
    b2d = b.reshape(1, d_out)

    # Batch tile: whole batch if small (block == full dim is always legal),
    # otherwise a multiple-of-8 tile that keeps per-step overhead negligible
    # and double-buffered tiles well under the scoped-VMEM limit on v7x.
    TB = B if B <= max_batch_tile else max_batch_tile
    grid = (pl.cdiv(B, TB),)

    cost = pl.CostEstimate(
        flops=2 * B * d_in * d_out,
        bytes_accessed=(B * d_in * 4            # x (f32)
                        + d_in * d_out * 2      # weight (bf16), streamed once
                        + d_out * 4             # bias (f32)
                        + B * d_out * 4),       # output (f32)
        transcendentals=B * d_out,              # tanh epilogue
    )

    return pl.pallas_call(
        linear_tanh_kernel,
        out_shape=jax.ShapeDtypeStruct((B, d_out), jnp.float32),
        grid=grid,
        in_specs=[
            pl.BlockSpec((TB, d_in), lambda i: (i, 0)),        # batch tile
            pl.BlockSpec((d_in, d_out), lambda i: (0, 0)),     # weight: resident
            pl.BlockSpec((1, d_out), lambda i: (0, 0)),        # bias: resident
        ],
        out_specs=pl.BlockSpec((TB, d_out), lambda i: (i, 0)),
        compiler_params=pltpu.CompilerParams(
            dimension_semantics=("parallel",),                 # v7x: 2 TCs split batch
        ),
        cost_estimate=cost,
    )(x, w_io, b2d)


if __name__ == "__main__":
    B = 2  # small batch of flattened 28x28 images

    key = jax.random.PRNGKey(0)
    kx, kw, kb = jax.random.split(key, 3)

    # Parameters mimic torch.nn.Linear's uniform init in its native
    # (out_features, in_features) layout.
    bound = 1.0 / (D ** 0.5)
    W_torch = jax.random.uniform(kw, (D, D), jnp.float32, -bound, bound)
    b = jax.random.uniform(kb, (D,), jnp.float32, -bound, bound)
    x = jax.random.normal(kx, (B, D), jnp.float32)

    # One-time, model-load-time parameter prep: (out, in) -> (in, out), bf16.
    # Done once per model, never per forward call, so the kernel's matmul is a
    # plain NN contraction with no in-kernel weight transpose.
    W_io = jnp.asarray(W_torch.T, dtype=jnp.bfloat16)

    out = jax.block_until_ready(linear_tanh(x, W_io, b))

    # Reference in plain JAX with the same bf16 weight/activation quantization
    # and f32 accumulation.
    ref = jnp.tanh(
        jnp.dot(x.astype(jnp.bfloat16).astype(jnp.float32),
                W_io.astype(jnp.float32)) + b)
    assert out.shape == (B, D)
    assert jnp.allclose(out, ref, atol=1e-2, rtol=1e-2)

    print("KERNEL_OK")
</pallas_src>

<mosaic_0001>
module attributes {stable_mosaic.version = 11 : i64} {
  func.func @linear_tanh_kernel(%arg0: i32, %arg1: memref<2x784xf32, #tpu.memory_space<vmem>>, %arg2: memref<784x784xbf16, #tpu.memory_space<vmem>>, %arg3: memref<1x784xf32, #tpu.memory_space<vmem>>, %arg4: memref<2x784xf32, #tpu.memory_space<vmem>>) attributes {dimension_semantics = [#tpu.dimension_semantics<parallel>], iteration_bounds = array<i64: 1>, scalar_prefetch = 0 : i64, scratch_operands = 0 : i64, tpu.core_type = #tpu.core_type<tc>, window_params = [{transform_indices = @transform_0, window_bounds = array<i64: 2, 784>}, {pipeline_mode = #tpu.pipeline_mode<synchronous>, transform_indices = @transform_1, window_bounds = array<i64: 784, 784>}, {pipeline_mode = #tpu.pipeline_mode<synchronous>, transform_indices = @transform_2, window_bounds = array<i64: 1, 784>}, {transform_indices = @transform_3, window_bounds = array<i64: 2, 784>}]} {
    %c0 = arith.constant 0 : index
    %c0_0 = arith.constant 0 : index
    %0 = vector.load %arg1[%c0, %c0_0] : memref<2x784xf32, #tpu.memory_space<vmem>>, vector<2x784xf32>
    %1 = arith.truncf %0 : vector<2x784xf32> to vector<2x784xbf16>
    %c0_1 = arith.constant 0 : index
    %c0_2 = arith.constant 0 : index
    %2 = vector.load %arg2[%c0_1, %c0_2] : memref<784x784xbf16, #tpu.memory_space<vmem>>, vector<784x784xbf16>
    %cst = arith.constant dense<0.000000e+00> : vector<2x784xf32>
    %3 = tpu.matmul %1, %2, %cst {dimension_numbers = #tpu.dot_dimension_numbers<[1], [0], [0], [1], [0, 0, 1, 1], [], []>} : vector<2x784xbf16>, vector<784x784xbf16>, vector<2x784xf32> -> vector<2x784xf32>
    %c0_3 = arith.constant 0 : index
    %c0_4 = arith.constant 0 : index
    %4 = vector.load %arg3[%c0_3, %c0_4] : memref<1x784xf32, #tpu.memory_space<vmem>>, vector<1x784xf32>
    %5 = vector.broadcast %4 : vector<1x784xf32> to vector<2x784xf32>
    %6 = arith.addf %3, %5 : vector<2x784xf32>
    %7 = math.tanh %6 : vector<2x784xf32>
    %c0_5 = arith.constant 0 : index
    %c0_6 = arith.constant 0 : index
    %8 = vector.load %arg4[%c0_5, %c0_6] : memref<2x784xf32, #tpu.memory_space<vmem>>, vector<2x784xf32>
    tpu.vector_store %arg4[%c0_5, %c0_6], %7 {strides = array<i32>} : memref<2x784xf32, #tpu.memory_space<vmem>>, vector<2x784xf32>,
    return
  }
  func.func @transform_0(%arg0: i32) -> (i32, i32) {
    %c0_i32 = arith.constant 0 : i32
    %c0_i32_0 = arith.constant 0 : i32
    return %arg0, %c0_i32 : i32, i32
  }
  func.func @transform_1(%arg0: i32) -> (i32, i32) {
    %c0_i32 = arith.constant 0 : i32
    %c0_i32_0 = arith.constant 0 : i32
    %c0_i32_1 = arith.constant 0 : i32
    return %c0_i32, %c0_i32_0 : i32, i32
  }
  func.func @transform_2(%arg0: i32) -> (i32, i32) {
    %c0_i32 = arith.constant 0 : i32
    %c0_i32_0 = arith.constant 0 : i32
    %c0_i32_1 = arith.constant 0 : i32
    return %c0_i32, %c0_i32_0 : i32, i32
  }
  func.func @transform_3(%arg0: i32) -> (i32, i32) {
    %c0_i32 = arith.constant 0 : i32
    %c0_i32_0 = arith.constant 0 : i32
    return %arg0, %c0_i32 : i32, i32
  }
}

</mosaic_0001>

<llo_original>
// kernel: tpu_custom_call.1
$region0: #{tpu_custom_call.1}
  #allocation0 [shape = 'u32[]', space=smem, size = 0x4, offset = 0x4, fixed_abs, tag = 'smem constant byte address 0x4 - core index']
  #allocation1 [shape = 'u32[144,128]{1,0:T(1,128)}', space=vmem, size = 0x12000, scoped, tag = 'internal scratch']
  %s0 = inlined_call_operand.hbm [shape: f32[2,784], index: 0, kind: input, shape index: {}]
  %s1 = inlined_call_operand.hbm [shape: bf16[784,784], index: 1, kind: input, shape index: {}]
  %s2 = inlined_call_operand.hbm [shape: f32[1,784], index: 2, kind: input, shape index: {}]
  %s3 = inlined_call_operand.hbm [shape: f32[2,784], index: 3, kind: output, shape index: {}]
  %s4 = sld [smem:[#allocation0]]
  $region34: #{tpu_custom_call.1} parent=0
    _
  %s6 = ssub.s32 1, %s4
  %s7 = scalar_select 0, %s6, %s4
  $region1: #{tpu_custom_call.1} parent=0
    #allocation2 [shape = 'u8[7168]{0}', space=vmem, size = 0x1c00, scoped, tag = 'input window, operand 0, single buffered']
    #allocation3 [shape = 's32[1]{0}', space=sflag, size = 0x4, scoped, tag = 'scoped memory for tpu_custom_call.1']
    #allocation4 [shape = 's32[1]{0}', space=sflag, size = 0x4, scoped, tag = 'scoped memory for tpu_custom_call.1']
    #allocation5 [shape = 'u8[1404928]{0}', space=vmem, size = 0x157000, scoped, tag = 'input window, operand 1, single buffered']
    #allocation6 [shape = 's32[1]{0}', space=sflag, size = 0x4, scoped, tag = 'scoped memory for tpu_custom_call.1']
    #allocation7 [shape = 'u8[3584]{0}', space=vmem, size = 0x1000, scoped, tag = 'input window, operand 2, single buffered']
    #allocation8 [shape = 'u8[7168]{0}', space=vmem, size = 0x1c00, scoped, tag = 'output window, operand 0, single buffered']
    %8 = vsyncpa [#allocation3], 0
    %9 = vsyncpa [#allocation6], 0
    %10 = vsyncpa [#allocation4], 0
    // Predicated region
    $region2: #{tpu_custom_call.1} parent=1 // pred_check
      _
    $region3: #{tpu_custom_call.1} parent=1 // pred_check_branch
      %12 = sbr.rel (0) target = $region5
    $region4: #{tpu_custom_call.1} parent=1 // pred_region
      %s14 = ssub.s32 224, 224
      %15 = vsyncadd [#allocation3], %s14
      %s17 = sshll.u32 [#allocation2], 4
      %s18 = int_to_ptr.vmem [resolvable:$true] %s17
      %20 = dma.hbm_to_vmem [thread:$0]  %s0, 224, %s18, [#allocation3]
    $region5: #{tpu_custom_call.1} parent=1 // pred_fallthru
      _
    // Predicated region
    $region6: #{tpu_custom_call.1} parent=1 // pred_check
      _
    $region7: #{tpu_custom_call.1} parent=1 // pred_check_branch
      %22 = sbr.rel (0) target = $region9
    $region8: #{tpu_custom_call.1} parent=1 // pred_region
      %s24 = ssub.s32 43904, 43904
      %25 = vsyncadd [#allocation6], %s24
      %s26 = sshll.u32 [#allocation5], 4
      %s27 = int_to_ptr.vmem [resolvable:$true] %s26
      %32 = dma.hbm_to_vmem [thread:$0]  %s1, 43904, %s27, [#allocation6], 448, 448, 28
    $region9: #{tpu_custom_call.1} parent=1 // pred_fallthru
      _
    // Predicated region
    $region10: #{tpu_custom_call.1} parent=1 // pred_check
      _
    $region11: #{tpu_custom_call.1} parent=1 // pred_check_branch
      %34 = sbr.rel (0) target = $region13
    $region12: #{tpu_custom_call.1} parent=1 // pred_region
      %s36 = ssub.s32 112, 112
      %37 = vsyncadd [#allocation6], %s36
      %s39 = sshll.u32 [#allocation7], 4
      %s40 = int_to_ptr.vmem [resolvable:$true] %s39
      %42 = dma.hbm_to_vmem [thread:$0]  %s2, 112, %s40, [#allocation6]
    $region13: #{tpu_custom_call.1} parent=1 // pred_fallthru
      _
    // Predicated region
    $region14: #{tpu_custom_call.1} parent=1 // pred_check
      _
    $region15: #{tpu_custom_call.1} parent=1 // pred_check_branch
      %44 = sbr.rel (0) target = $region17
    $region16: #{tpu_custom_call.1} parent=1 // pred_region
      %45 = dma.done [#allocation3], 224
    $region17: #{tpu_custom_call.1} parent=1 // pred_fallthru
      _
    // Predicated region
    $region18: #{tpu_custom_call.1} parent=1 // pred_check
      _
    $region19: #{tpu_custom_call.1} parent=1 // pred_check_branch
      %47 = sbr.rel (0) target = $region21
    $region20: #{tpu_custom_call.1} parent=1 // pred_region
      %48 = dma.done [#allocation6], 43904
    $region21: #{tpu_custom_call.1} parent=1 // pred_fallthru
      _
    // Predicated region
    $region22: #{tpu_custom_call.1} parent=1 // pred_check
      _
    $region23: #{tpu_custom_call.1} parent=1 // pred_check_branch
      %50 = sbr.rel (0) target = $region25
    $region24: #{tpu_custom_call.1} parent=1 // pred_region
      %51 = dma.done [#allocation6], 112
    $region25: #{tpu_custom_call.1} parent=1 // pred_fallthru
      _
    %v53 = vld [vmem:[#allocation2] sm:$0xff]
    %v54 = vld [vmem:[#allocation2 + $0x8] sm:$0x3f]
    %v57 = vcombine.high %v53, %v53
    %v59 = vunpack.c.l.s4 1983009808
    %v60 = vunpack.c.0.s8 %v59
    %v61 = vlaneseq
    %v62 = vshrl.u32 %v61, 7
    %v63 = vsub.s32 %v60, %v62
    %v64 = vrot.slane %v53, %v63
    %v66 = vunpack.c.l.s4 1983009808
    %v67 = vunpack.c.0.s8 %v66
    %v68 = vlaneseq
    %v69 = vshrl.u32 %v68, 7
    %v70 = vsub.s32 %v67, %v69
    %v71 = vrot.slane %v57, %v70
    %v72 = vcombine.high %v64, %v64
    %v73 = vcombine.high %v71, %v71
    %v74 = vcombine.high %v54, %v54
    %v76 = vunpack.c.l.s4 1983009808
    %v77 = vunpack.c.0.s8 %v76
    %v78 = vlaneseq
    %v79 = vshrl.u32 %v78, 7
    %v80 = vsub.s32 %v77, %v79
    %v81 = vrot.slane %v54, %v80
    %v83 = vunpack.c.l.s4 1983009808
    %v84 = vunpack.c.0.s8 %v83
    %v85 = vlaneseq
    %v86 = vshrl.u32 %v85, 7
    %v87 = vsub.s32 %v84, %v86
    %v88 = vrot.slane %v74, %v87
    %v89 = vcombine.high %v81, %v81
    %v97 = vpack.c.bf16 %v64, %v64
    %v98 = vpack.c.bf16 %v72, %v72
    %v99 = vpack.c.bf16 %v71, %v71
    %v100 = vpack.c.bf16 %v73, %v73
    %v101 = vpack.c.bf16 %v81, %v81
    %v102 = vpack.c.bf16 %v89, %v89
    %v103 = vpack.c.bf16 %v88, %v88
    %v104 = vld [vmem:[#allocation5] sm:$0xff]
    %v105 = vld [vmem:[#allocation5 + $0x8] sm:$0xff]
    %v106 = vld [vmem:[#allocation5 + $0x10] sm:$0xff]
    %v107 = vld [vmem:[#allocation5 + $0x18] sm:$0xf]
    %v108 = vld [vmem:[#allocation5 + $0x1c] sm:$0xff]
    %v109 = vld [vmem:[#allocation5 + $0x24] sm:$0xff]
    %v110 = vld [vmem:[#allocation5 + $0x2c] sm:$0xff]
    %v111 = vld [vmem:[#allocation5 + $0x34] sm:$0xf]
    %v112 = vld [vmem:[#allocation5 + $0x38] sm:$0xff]
    %v113 = vld [vmem:[#allocation5 + $0x40] sm:$0xff]
    %v114 = vld [vmem:[#allocation5 + $0x48] sm:$0xff]
    %v115 = vld [vmem:[#allocation5 + $0x50] sm:$0xf]
    %v116 = vld [vmem:[#allocation5 + $0x54] sm:$0xff]
    %v117 = vld [vmem:[#allocation5 + $0x5c] sm:$0xff]
    %v118 = vld [vmem:[#allocation5 + $0x64] sm:$0xff]
    %v119 = vld [vmem:[#allocation5 + $0x6c] sm:$0xf]
    %v120 = vld [vmem:[#allocation5 + $0x70] sm:$0xff]
    %v121 = vld [vmem:[#allocation5 + $0x78] sm:$0xff]
    %v122 = vld [vmem:[#allocation5 + $0x80] sm:$0xff]
    %v123 = vld [vmem:[#allocation5 + $0x88] sm:$0xf]
    %v124 = vld [vmem:[#allocation5 + $0x8c] sm:$0xff]
    %v125 = vld [vmem:[#allocation5 + $0x94] sm:$0xff]
    %v126 = vld [vmem:[#allocation5 + $0x9c] sm:$0xff]
    %v127 = vld [vmem:[#allocation5 + $0xa4] sm:$0xf]
    %v128 = vld [vmem:[#allocation5 + $0xa8] sm:$0xff]
    %v129 = vld [vmem:[#allocation5 + $0xb0] sm:$0xff]
    %v130 = vld [vmem:[#allocation5 + $0xb8] sm:$0xff]
    %v131 = vld [vmem:[#allocation5 + $0xc0] sm:$0xf]
    %v132 = vld [vmem:[#allocation5 + $0xc4] sm:$0xff]
    %v133 = vld [vmem:[#allocation5 + $0xcc] sm:$0xff]
    %v134 = vld [vmem:[#allocation5 + $0xd4] sm:$0xff]
    %v135 = vld [vmem:[#allocation5 + $0xdc] sm:$0xf]
    %v136 = vld [vmem:[#allocation5 + $0xe0] sm:$0xff]
    %v137 = vld [vmem:[#allocation5 + $0xe8] sm:$0xff]
    %v138 = vld [vmem:[#allocation5 + $0xf0] sm:$0xff]
    %v139 = vld [vmem:[#allocation5 + $0xf8] sm:$0xf]
    %v140 = vld [vmem:[#allocation5 + $0xfc] sm:$0xff]
    %v141 = vld [vmem:[#allocation5 + $0x104] sm:$0xff]
    %v142 = vld [vmem:[#allocation5 + $0x10c] sm:$0xff]
    %v143 = vld [vmem:[#allocation5 + $0x114] sm:$0xf]
    %v144 = vld [vmem:[#allocation5 + $0x118] sm:$0xff]
    %v145 = vld [vmem:[#allocation5 + $0x120] sm:$0xff]
    %v146 = vld [vmem:[#allocation5 + $0x128] sm:$0xff]
    %v147 = vld [vmem:[#allocation5 + $0x130] sm:$0xf]
    %v148 = vld [vmem:[#allocation5 + $0x134] sm:$0xff]
    %v149 = vld [vmem:[#allocation5 + $0x13c] sm:$0xff]
    %v150 = vld [vmem:[#allocation5 + $0x144] sm:$0xff]
    %v151 = vld [vmem:[#allocation5 + $0x14c] sm:$0xf]
    %v152 = vld [vmem:[#allocation5 + $0x150] sm:$0xff]
    %v153 = vld [vmem:[#allocation5 + $0x158] sm:$0xff]
    %v154 = vld [vmem:[#allocation5 + $0x160] sm:$0xff]
    %v155 = vld [vmem:[#allocation5 + $0x168] sm:$0xf]
    %v156 = vld [vmem:[#allocation5 + $0x16c] sm:$0xff]
    %v157 = vld [vmem:[#allocation5 + $0x174] sm:$0xff]
    %v158 = vld [vmem:[#allocation5 + $0x17c] sm:$0xff]
    %v159 = vld [vmem:[#allocation5 + $0x184] sm:$0xf]
    %v160 = vld [vmem:[#allocation5 + $0x188] sm:$0xff]
    %v161 = vld [vmem:[#allocation5 + $0x190] sm:$0xff]
    %v162 = vld [vmem:[#allocation5 + $0x198] sm:$0xff]
    %v163 = vld [vmem:[#allocation5 + $0x1a0] sm:$0xf]
    %v164 = vld [vmem:[#allocation5 + $0x1a4] sm:$0xff]
    %v165 = vld [vmem:[#allocation5 + $0x1ac] sm:$0xff]
    %v166 = vld [vmem:[#allocation5 + $0x1b4] sm:$0xff]
    %v167 = vld [vmem:[#allocation5 + $0x1bc] sm:$0xf]
    %v168 = vld [vmem:[#allocation5 + $0x1c0] sm:$0xff]
    %v169 = vld [vmem:[#allocation5 + $0x1c8] sm:$0xff]
    %v170 = vld [vmem:[#allocation5 + $0x1d0] sm:$0xff]
    %v171 = vld [vmem:[#allocation5 + $0x1d8] sm:$0xf]
    %v172 = vld [vmem:[#allocation5 + $0x1dc] sm:$0xff]
    %v173 = vld [vmem:[#allocation5 + $0x1e4] sm:$0xff]
    %v174 = vld [vmem:[#allocation5 + $0x1ec] sm:$0xff]
    %v175 = vld [vmem:[#allocation5 + $0x1f4] sm:$0xf]
    %v176 = vld [vmem:[#allocation5 + $0x1f8] sm:$0xff]
    %v177 = vld [vmem:[#allocation5 + $0x200] sm:$0xff]
    %v178 = vld [vmem:[#allocation5 + $0x208] sm:$0xff]
    %v179 = vld [vmem:[#allocation5 + $0x210] sm:$0xf]
    %v180 = vld [vmem:[#allocation5 + $0x214] sm:$0xff]
    %v181 = vld [vmem:[#allocation5 + $0x21c] sm:$0xff]
    %v182 = vld [vmem:[#allocation5 + $0x224] sm:$0xff]
    %v183 = vld [vmem:[#allocation5 + $0x22c] sm:$0xf]
    %v184 = vld [vmem:[#allocation5 + $0x230] sm:$0xff]
    %v185 = vld [vmem:[#allocation5 + $0x238] sm:$0xff]
    %v186 = vld [vmem:[#allocation5 + $0x240] sm:$0xff]
    %v187 = vld [vmem:[#allocation5 + $0x248] sm:$0xf]
    %v188 = vld [vmem:[#allocation5 + $0x24c] sm:$0xff]
    %v189 = vld [vmem:[#allocation5 + $0x254] sm:$0xff]
    %v190 = vld [vmem:[#allocation5 + $0x25c] sm:$0xff]
    %v191 = vld [vmem:[#allocation5 + $0x264] sm:$0xf]
    %v192 = vld [vmem:[#allocation5 + $0x268] sm:$0xff]
    %v193 = vld [vmem:[#allocation5 + $0x270] sm:$0xff]
    %v194 = vld [vmem:[#allocation5 + $0x278] sm:$0xff]
    %v195 = vld [vmem:[#allocation5 + $0x280] sm:$0xf]
    %v196 = vld [vmem:[#allocation5 + $0x284] sm:$0xff]
    %v197 = vld [vmem:[#allocation5 + $0x28c] sm:$0xff]
    %v198 = vld [vmem:[#allocation5 + $0x294] sm:$0xff]
    %v199 = vld [vmem:[#allocation5 + $0x29c] sm:$0xf]
    %v200 = vld [vmem:[#allocation5 + $0x2a0] sm:$0xff]
    %v201 = vld [vmem:[#allocation5 + $0x2a8] sm:$0xff]
    %v202 = vld [vmem:[#allocation5 + $0x2b0] sm:$0xff]
    %v203 = vld [vmem:[#allocation5 + $0x2b8] sm:$0xf]
    %v204 = vld [vmem:[#allocation5 + $0x2bc] sm:$0xff]
    %v205 = vld [vmem:[#allocation5 + $0x2c4] sm:$0xff]
    %v206 = vld [vmem:[#allocation5 + $0x2cc] sm:$0xff]
    %v207 = vld [vmem:[#allocation5 + $0x2d4] sm:$0xf]
    %v208 = vld [vmem:[#allocation5 + $0x2d8] sm:$0xff]
    %v209 = vld [vmem:[#allocation5 + $0x2e0] sm:$0xff]
    %v210 = vld [vmem:[#allocation5 + $0x2e8] sm:$0xff]
    %v211 = vld [vmem:[#allocation5 + $0x2f0] sm:$0xf]
    %v212 = vld [vmem:[#allocation5 + $0x2f4] sm:$0xff]
    %v213 = vld [vmem:[#allocation5 + $0x2fc] sm:$0xff]
    %v214 = vld [vmem:[#allocation5 + $0x304] sm:$0xff]
    %v215 = vld [vmem:[#allocation5 + $0x30c] sm:$0xf]
    %v216 = vld [vmem:[#allocation5 + $0x310] sm:$0xff]
    %v217 = vld [vmem:[#allocation5 + $0x318] sm:$0xff]
    %v218 = vld [vmem:[#allocation5 + $0x320] sm:$0xff]
    %v219 = vld [vmem:[#allocation5 + $0x328] sm:$0xf]
    %v220 = vld [vmem:[#allocation5 + $0x32c] sm:$0xff]
    %v221 = vld [vmem:[#allocation5 + $0x334] sm:$0xff]
    %v222 = vld [vmem:[#allocation5 + $0x33c] sm:$0xff]
    %v223 = vld [vmem:[#allocation5 + $0x344] sm:$0xf]
    %v224 = vld [vmem:[#allocation5 + $0x348] sm:$0xff]
    %v225 = vld [vmem:[#allocation5 + $0x350] sm:$0xff]
    %v226 = vld [vmem:[#allocation5 + $0x358] sm:$0xff]
    %v227 = vld [vmem:[#allocation5 + $0x360] sm:$0xf]
    %v228 = vld [vmem:[#allocation5 + $0x364] sm:$0xff]
    %v229 = vld [vmem:[#allocation5 + $0x36c] sm:$0xff]
    %v230 = vld [vmem:[#allocation5 + $0x374] sm:$0xff]
    %v231 = vld [vmem:[#allocation5 + $0x37c] sm:$0xf]
    %v232 = vld [vmem:[#allocation5 + $0x380] sm:$0xff]
    %v233 = vld [vmem:[#allocation5 + $0x388] sm:$0xff]
    %v234 = vld [vmem:[#allocation5 + $0x390] sm:$0xff]
    %v235 = vld [vmem:[#allocation5 + $0x398] sm:$0xf]
    %v236 = vld [vmem:[#allocation5 + $0x39c] sm:$0xff]
    %v237 = vld [vmem:[#allocation5 + $0x3a4] sm:$0xff]
    %v238 = vld [vmem:[#allocation5 + $0x3ac] sm:$0xff]
    %v239 = vld [vmem:[#allocation5 + $0x3b4] sm:$0xf]
    %v240 = vld [vmem:[#allocation5 + $0x3b8] sm:$0xff]
    %v241 = vld [vmem:[#allocation5 + $0x3c0] sm:$0xff]
    %v242 = vld [vmem:[#allocation5 + $0x3c8] sm:$0xff]
    %v243 = vld [vmem:[#allocation5 + $0x3d0] sm:$0xf]
    %v244 = vld [vmem:[#allocation5 + $0x3d4] sm:$0xff]
    %v245 = vld [vmem:[#allocation5 + $0x3dc] sm:$0xff]
    %v246 = vld [vmem:[#allocation5 + $0x3e4] sm:$0xff]
    %v247 = vld [vmem:[#allocation5 + $0x3ec] sm:$0xf]
    %v248 = vld [vmem:[#allocation5 + $0x3f0] sm:$0xff]
    %v249 = vld [vmem:[#allocation5 + $0x3f8] sm:$0xff]
    %v250 = vld [vmem:[#allocation5 + $0x400] sm:$0xff]
    %v251 = vld [vmem:[#allocation5 + $0x408] sm:$0xf]
    %v252 = vld [vmem:[#allocation5 + $0x40c] sm:$0xff]
    %v253 = vld [vmem:[#allocation5 + $0x414] sm:$0xff]
    %v254 = vld [vmem:[#allocation5 + $0x41c] sm:$0xff]
    %v255 = vld [vmem:[#allocation5 + $0x424] sm:$0xf]
    %v256 = vld [vmem:[#allocation5 + $0x428] sm:$0xff]
    %v257 = vld [vmem:[#allocation5 + $0x430] sm:$0xff]
    %v258 = vld [vmem:[#allocation5 + $0x438] sm:$0xff]
    %v259 = vld [vmem:[#allocation5 + $0x440] sm:$0xf]
    %v260 = vld [vmem:[#allocation5 + $0x444] sm:$0xff]
    %v261 = vld [vmem:[#allocation5 + $0x44c] sm:$0xff]
    %v262 = vld [vmem:[#allocation5 + $0x454] sm:$0xff]
    %v263 = vld [vmem:[#allocation5 + $0x45c] sm:$0xf]
    %v264 = vld [vmem:[#allocation5 + $0x460] sm:$0xff]
    %v265 = vld [vmem:[#allocation5 + $0x468] sm:$0xff]
    %v266 = vld [vmem:[#allocation5 + $0x470] sm:$0xff]
    %v267 = vld [vmem:[#allocation5 + $0x478] sm:$0xf]
    %v268 = vld [vmem:[#allocation5 + $0x47c] sm:$0xff]
    %v269 = vld [vmem:[#allocation5 + $0x484] sm:$0xff]
    %v270 = vld [vmem:[#allocation5 + $0x48c] sm:$0xff]
    %v271 = vld [vmem:[#allocation5 + $0x494] sm:$0xf]
    %v272 = vld [vmem:[#allocation5 + $0x498] sm:$0xff]
    %v273 = vld [vmem:[#allocation5 + $0x4a0] sm:$0xff]
    %v274 = vld [vmem:[#allocation5 + $0x4a8] sm:$0xff]
    %v275 = vld [vmem:[#allocation5 + $0x4b0] sm:$0xf]
    %v276 = vld [vmem:[#allocation5 + $0x4b4] sm:$0xff]
    %v277 = vld [vmem:[#allocation5 + $0x4bc] sm:$0xff]
    %v278 = vld [vmem:[#allocation5 + $0x4c4] sm:$0xff]
    %v279 = vld [vmem:[#allocation5 + $0x4cc] sm:$0xf]
    %v280 = vld [vmem:[#allocation5 + $0x4d0] sm:$0xff]
    %v281 = vld [vmem:[#allocation5 + $0x4d8] sm:$0xff]
    %v282 = vld [vmem:[#allocation5 + $0x4e0] sm:$0xff]
    %v283 = vld [vmem:[#allocation5 + $0x4e8] sm:$0xf]
    %v284 = vld [vmem:[#allocation5 + $0x4ec] sm:$0xff]
    %v285 = vld [vmem:[#allocation5 + $0x4f4] sm:$0xff]
    %v286 = vld [vmem:[#allocation5 + $0x4fc] sm:$0xff]
    %v287 = vld [vmem:[#allocation5 + $0x504] sm:$0xf]
    %v288 = vld [vmem:[#allocation5 + $0x508] sm:$0xff]
    %v289 = vld [vmem:[#allocation5 + $0x510] sm:$0xff]
    %v290 = vld [vmem:[#allocation5 + $0x518] sm:$0xff]
    %v291 = vld [vmem:[#allocation5 + $0x520] sm:$0xf]
    %v292 = vld [vmem:[#allocation5 + $0x524] sm:$0xff]
    %v293 = vld [vmem:[#allocation5 + $0x52c] sm:$0xff]
    %v294 = vld [vmem:[#allocation5 + $0x534] sm:$0xff]
    %v295 = vld [vmem:[#allocation5 + $0x53c] sm:$0xf]
    %v296 = vld [vmem:[#allocation5 + $0x540] sm:$0xff]
    %v297 = vld [vmem:[#allocation5 + $0x548] sm:$0xff]
    %v298 = vld [vmem:[#allocation5 + $0x550] sm:$0xff]
    %v299 = vld [vmem:[#allocation5 + $0x558] sm:$0xf]
    %v300 = vld [vmem:[#allocation5 + $0x55c] sm:$0xff]
    %v301 = vld [vmem:[#allocation5 + $0x564] sm:$0xff]
    %v302 = vld [vmem:[#allocation5 + $0x56c] sm:$0xff]
    %v303 = vld [vmem:[#allocation5 + $0x574] sm:$0xf]
    %v304 = vld [vmem:[#allocation5 + $0x578] sm:$0xff]
    %v305 = vld [vmem:[#allocation5 + $0x580] sm:$0xff]
    %v306 = vld [vmem:[#allocation5 + $0x588] sm:$0xff]
    %v307 = vld [vmem:[#allocation5 + $0x590] sm:$0xf]
    %v308 = vld [vmem:[#allocation5 + $0x594] sm:$0xff]
    %v309 = vld [vmem:[#allocation5 + $0x59c] sm:$0xff]
    %v310 = vld [vmem:[#allocation5 + $0x5a4] sm:$0xff]
    %v311 = vld [vmem:[#allocation5 + $0x5ac] sm:$0xf]
    %v312 = vld [vmem:[#allocation5 + $0x5b0] sm:$0xff]
    %v313 = vld [vmem:[#allocation5 + $0x5b8] sm:$0xff]
    %v314 = vld [vmem:[#allocation5 + $0x5c0] sm:$0xff]
    %v315 = vld [vmem:[#allocation5 + $0x5c8] sm:$0xf]
    %v316 = vld [vmem:[#allocation5 + $0x5cc] sm:$0xff]
    %v317 = vld [vmem:[#allocation5 + $0x5d4] sm:$0xff]
    %v318 = vld [vmem:[#allocation5 + $0x5dc] sm:$0xff]
    %v319 = vld [vmem:[#allocation5 + $0x5e4] sm:$0xf]
    %v320 = vld [vmem:[#allocation5 + $0x5e8] sm:$0xff]
    %v321 = vld [vmem:[#allocation5 + $0x5f0] sm:$0xff]
    %v322 = vld [vmem:[#allocation5 + $0x5f8] sm:$0xff]
    %v323 = vld [vmem:[#allocation5 + $0x600] sm:$0xf]
    %v324 = vld [vmem:[#allocation5 + $0x604] sm:$0xff]
    %v325 = vld [vmem:[#allocation5 + $0x60c] sm:$0xff]
    %v326 = vld [vmem:[#allocation5 + $0x614] sm:$0xff]
    %v327 = vld [vmem:[#allocation5 + $0x61c] sm:$0xf]
    %v328 = vld [vmem:[#allocation5 + $0x620] sm:$0xff]
    %v329 = vld [vmem:[#allocation5 + $0x628] sm:$0xff]
    %v330 = vld [vmem:[#allocation5 + $0x630] sm:$0xff]
    %v331 = vld [vmem:[#allocation5 + $0x638] sm:$0xf]
    %v332 = vld [vmem:[#allocation5 + $0x63c] sm:$0xff]
    %v333 = vld [vmem:[#allocation5 + $0x644] sm:$0xff]
    %v334 = vld [vmem:[#allocation5 + $0x64c] sm:$0xff]
    %v335 = vld [vmem:[#allocation5 + $0x654] sm:$0xf]
    %v336 = vld [vmem:[#allocation5 + $0x658] sm:$0xff]
    %v337 = vld [vmem:[#allocation5 + $0x660] sm:$0xff]
    %v338 = vld [vmem:[#allocation5 + $0x668] sm:$0xff]
    %v339 = vld [vmem:[#allocation5 + $0x670] sm:$0xf]
    %v340 = vld [vmem:[#allocation5 + $0x674] sm:$0xff]
    %v341 = vld [vmem:[#allocation5 + $0x67c] sm:$0xff]
    %v342 = vld [vmem:[#allocation5 + $0x684] sm:$0xff]
    %v343 = vld [vmem:[#allocation5 + $0x68c] sm:$0xf]
    %v344 = vld [vmem:[#allocation5 + $0x690] sm:$0xff]
    %v345 = vld [vmem:[#allocation5 + $0x698] sm:$0xff]
    %v346 = vld [vmem:[#allocation5 + $0x6a0] sm:$0xff]
    %v347 = vld [vmem:[#allocation5 + $0x6a8] sm:$0xf]
    %v348 = vld [vmem:[#allocation5 + $0x6ac] sm:$0xff]
    %v349 = vld [vmem:[#allocation5 + $0x6b4] sm:$0xff]
    %v350 = vld [vmem:[#allocation5 + $0x6bc] sm:$0xff]
    %v351 = vld [vmem:[#allocation5 + $0x6c4] sm:$0xf]
    %v352 = vld [vmem:[#allocation5 + $0x6c8] sm:$0xff]
    %v353 = vld [vmem:[#allocation5 + $0x6d0] sm:$0xff]
    %v354 = vld [vmem:[#allocation5 + $0x6d8] sm:$0xff]
    %v355 = vld [vmem:[#allocation5 + $0x6e0] sm:$0xf]
    %v356 = vld [vmem:[#allocation5 + $0x6e4] sm:$0xff]
    %v357 = vld [vmem:[#allocation5 + $0x6ec] sm:$0xff]
    %v358 = vld [vmem:[#allocation5 + $0x6f4] sm:$0xff]
    %v359 = vld [vmem:[#allocation5 + $0x6fc] sm:$0xf]
    %v360 = vld [vmem:[#allocation5 + $0x700] sm:$0xff]
    %v361 = vld [vmem:[#allocation5 + $0x708] sm:$0xff]
    %v362 = vld [vmem:[#allocation5 + $0x710] sm:$0xff]
    %v363 = vld [vmem:[#allocation5 + $0x718] sm:$0xf]
    %v364 = vld [vmem:[#allocation5 + $0x71c] sm:$0xff]
    %v365 = vld [vmem:[#allocation5 + $0x724] sm:$0xff]
    %v366 = vld [vmem:[#allocation5 + $0x72c] sm:$0xff]
    %v367 = vld [vmem:[#allocation5 + $0x734] sm:$0xf]
    %v368 = vld [vmem:[#allocation5 + $0x738] sm:$0xff]
    %v369 = vld [vmem:[#allocation5 + $0x740] sm:$0xff]
    %v370 = vld [vmem:[#allocation5 + $0x748] sm:$0xff]
    %v371 = vld [vmem:[#allocation5 + $0x750] sm:$0xf]
    %v372 = vld [vmem:[#allocation5 + $0x754] sm:$0xff]
    %v373 = vld [vmem:[#allocation5 + $0x75c] sm:$0xff]
    %v374 = vld [vmem:[#allocation5 + $0x764] sm:$0xff]
    %v375 = vld [vmem:[#allocation5 + $0x76c] sm:$0xf]
    %v376 = vld [vmem:[#allocation5 + $0x770] sm:$0xff]
    %v377 = vld [vmem:[#allocation5 + $0x778] sm:$0xff]
    %v378 = vld [vmem:[#allocation5 + $0x780] sm:$0xff]
    %v379 = vld [vmem:[#allocation5 + $0x788] sm:$0xf]
    %v380 = vld [vmem:[#allocation5 + $0x78c] sm:$0xff]
    %v381 = vld [vmem:[#allocation5 + $0x794] sm:$0xff]
    %v382 = vld [vmem:[#allocation5 + $0x79c] sm:$0xff]
    %v383 = vld [vmem:[#allocation5 + $0x7a4] sm:$0xf]
    %v384 = vld [vmem:[#allocation5 + $0x7a8] sm:$0xff]
    %v385 = vld [vmem:[#allocation5 + $0x7b0] sm:$0xff]
    %v386 = vld [vmem:[#allocation5 + $0x7b8] sm:$0xff]
    %v387 = vld [vmem:[#allocation5 + $0x7c0] sm:$0xf]
    %v388 = vld [vmem:[#allocation5 + $0x7c4] sm:$0xff]
    %v389 = vld [vmem:[#allocation5 + $0x7cc] sm:$0xff]
    %v390 = vld [vmem:[#allocation5 + $0x7d4] sm:$0xff]
    %v391 = vld [vmem:[#allocation5 + $0x7dc] sm:$0xf]
    %v392 = vld [vmem:[#allocation5 + $0x7e0] sm:$0xff]
    %v393 = vld [vmem:[#allocation5 + $0x7e8] sm:$0xff]
    %v394 = vld [vmem:[#allocation5 + $0x7f0] sm:$0xff]
    %v395 = vld [vmem:[#allocation5 + $0x7f8] sm:$0xf]
    %v396 = vld [vmem:[#allocation5 + $0x7fc] sm:$0xff]
    %v397 = vld [vmem:[#allocation5 + $0x804] sm:$0xff]
    %v398 = vld [vmem:[#allocation5 + $0x80c] sm:$0xff]
    %v399 = vld [vmem:[#allocation5 + $0x814] sm:$0xf]
    %v400 = vld [vmem:[#allocation5 + $0x818] sm:$0xff]
    %v401 = vld [vmem:[#allocation5 + $0x820] sm:$0xff]
    %v402 = vld [vmem:[#allocation5 + $0x828] sm:$0xff]
    %v403 = vld [vmem:[#allocation5 + $0x830] sm:$0xf]
    %v404 = vld [vmem:[#allocation5 + $0x834] sm:$0xff]
    %v405 = vld [vmem:[#allocation5 + $0x83c] sm:$0xff]
    %v406 = vld [vmem:[#allocation5 + $0x844] sm:$0xff]
    %v407 = vld [vmem:[#allocation5 + $0x84c] sm:$0xf]
    %v408 = vld [vmem:[#allocation5 + $0x850] sm:$0xff]
    %v409 = vld [vmem:[#allocation5 + $0x858] sm:$0xff]
    %v410 = vld [vmem:[#allocation5 + $0x860] sm:$0xff]
    %v411 = vld [vmem:[#allocation5 + $0x868] sm:$0xf]
    %v412 = vld [vmem:[#allocation5 + $0x86c] sm:$0xff]
    %v413 = vld [vmem:[#allocation5 + $0x874] sm:$0xff]
    %v414 = vld [vmem:[#allocation5 + $0x87c] sm:$0xff]
    %v415 = vld [vmem:[#allocation5 + $0x884] sm:$0xf]
    %v416 = vld [vmem:[#allocation5 + $0x888] sm:$0xff]
    %v417 = vld [vmem:[#allocation5 + $0x890] sm:$0xff]
    %v418 = vld [vmem:[#allocation5 + $0x898] sm:$0xff]
    %v419 = vld [vmem:[#allocation5 + $0x8a0] sm:$0xf]
    %v420 = vld [vmem:[#allocation5 + $0x8a4] sm:$0xff]
    %v421 = vld [vmem:[#allocation5 + $0x8ac] sm:$0xff]
    %v422 = vld [vmem:[#allocation5 + $0x8b4] sm:$0xff]
    %v423 = vld [vmem:[#allocation5 + $0x8bc] sm:$0xf]
    %v424 = vld [vmem:[#allocation5 + $0x8c0] sm:$0xff]
    %v425 = vld [vmem:[#allocation5 + $0x8c8] sm:$0xff]
    %v426 = vld [vmem:[#allocation5 + $0x8d0] sm:$0xff]
    %v427 = vld [vmem:[#allocation5 + $0x8d8] sm:$0xf]
    %v428 = vld [vmem:[#allocation5 + $0x8dc] sm:$0xff]
    %v429 = vld [vmem:[#allocation5 + $0x8e4] sm:$0xff]
    %v430 = vld [vmem:[#allocation5 + $0x8ec] sm:$0xff]
    %v431 = vld [vmem:[#allocation5 + $0x8f4] sm:$0xf]
    %v432 = vld [vmem:[#allocation5 + $0x8f8] sm:$0xff]
    %v433 = vld [vmem:[#allocation5 + $0x900] sm:$0xff]
    %v434 = vld [vmem:[#allocation5 + $0x908] sm:$0xff]
    %v435 = vld [vmem:[#allocation5 + $0x910] sm:$0xf]
    %v436 = vld [vmem:[#allocation5 + $0x914] sm:$0xff]
    %v437 = vld [vmem:[#allocation5 + $0x91c] sm:$0xff]
    %v438 = vld [vmem:[#allocation5 + $0x924] sm:$0xff]
    %v439 = vld [vmem:[#allocation5 + $0x92c] sm:$0xf]
    %v440 = vld [vmem:[#allocation5 + $0x930] sm:$0xff]
    %v441 = vld [vmem:[#allocation5 + $0x938] sm:$0xff]
    %v442 = vld [vmem:[#allocation5 + $0x940] sm:$0xff]
    %v443 = vld [vmem:[#allocation5 + $0x948] sm:$0xf]
    %v444 = vld [vmem:[#allocation5 + $0x94c] sm:$0xff]
    %v445 = vld [vmem:[#allocation5 + $0x954] sm:$0xff]
    %v446 = vld [vmem:[#allocation5 + $0x95c] sm:$0xff]
    %v447 = vld [vmem:[#allocation5 + $0x964] sm:$0xf]
    %v448 = vld [vmem:[#allocation5 + $0x968] sm:$0xff]
    %v449 = vld [vmem:[#allocation5 + $0x970] sm:$0xff]
    %v450 = vld [vmem:[#allocation5 + $0x978] sm:$0xff]
    %v451 = vld [vmem:[#allocation5 + $0x980] sm:$0xf]
    %v452 = vld [vmem:[#allocation5 + $0x984] sm:$0xff]
    %v453 = vld [vmem:[#allocation5 + $0x98c] sm:$0xff]
    %v454 = vld [vmem:[#allocation5 + $0x994] sm:$0xff]
    %v455 = vld [vmem:[#allocation5 + $0x99c] sm:$0xf]
    %v456 = vld [vmem:[#allocation5 + $0x9a0] sm:$0xff]
    %v457 = vld [vmem:[#allocation5 + $0x9a8] sm:$0xff]
    %v458 = vld [vmem:[#allocation5 + $0x9b0] sm:$0xff]
    %v459 = vld [vmem:[#allocation5 + $0x9b8] sm:$0xf]
    %v460 = vld [vmem:[#allocation5 + $0x9bc] sm:$0xff]
    %v461 = vld [vmem:[#allocation5 + $0x9c4] sm:$0xff]
    %v462 = vld [vmem:[#allocation5 + $0x9cc] sm:$0xff]
    %v463 = vld [vmem:[#allocation5 + $0x9d4] sm:$0xf]
    %v464 = vld [vmem:[#allocation5 + $0x9d8] sm:$0xff]
    %v465 = vld [vmem:[#allocation5 + $0x9e0] sm:$0xff]
    %v466 = vld [vmem:[#allocation5 + $0x9e8] sm:$0xff]
    %v467 = vld [vmem:[#allocation5 + $0x9f0] sm:$0xf]
    %v468 = vld [vmem:[#allocation5 + $0x9f4] sm:$0xff]
    %v469 = vld [vmem:[#allocation5 + $0x9fc] sm:$0xff]
    %v470 = vld [vmem:[#allocation5 + $0xa04] sm:$0xff]
    %v471 = vld [vmem:[#allocation5 + $0xa0c] sm:$0xf]
    %v472 = vld [vmem:[#allocation5 + $0xa10] sm:$0xff]
    %v473 = vld [vmem:[#allocation5 + $0xa18] sm:$0xff]
    %v474 = vld [vmem:[#allocation5 + $0xa20] sm:$0xff]
    %v475 = vld [vmem:[#allocation5 + $0xa28] sm:$0xf]
    %v476 = vld [vmem:[#allocation5 + $0xa2c] sm:$0xff]
    %v477 = vld [vmem:[#allocation5 + $0xa34] sm:$0xff]
    %v478 = vld [vmem:[#allocation5 + $0xa3c] sm:$0xff]
    %v479 = vld [vmem:[#allocation5 + $0xa44] sm:$0xf]
    %v480 = vld [vmem:[#allocation5 + $0xa48] sm:$0xff]
    %v481 = vld [vmem:[#allocation5 + $0xa50] sm:$0xff]
    %v482 = vld [vmem:[#allocation5 + $0xa58] sm:$0xff]
    %v483 = vld [vmem:[#allocation5 + $0xa60] sm:$0xf]
    %v484 = vld [vmem:[#allocation5 + $0xa64] sm:$0xff]
    %v485 = vld [vmem:[#allocation5 + $0xa6c] sm:$0xff]
    %v486 = vld [vmem:[#allocation5 + $0xa74] sm:$0xff]
    %v487 = vld [vmem:[#allocation5 + $0xa7c] sm:$0xf]
    %v488 = vld [vmem:[#allocation5 + $0xa80] sm:$0xff]
    %v489 = vld [vmem:[#allocation5 + $0xa88] sm:$0xff]
    %v490 = vld [vmem:[#allocation5 + $0xa90] sm:$0xff]
    %v491 = vld [vmem:[#allocation5 + $0xa98] sm:$0xf]
    %v492 = vld [vmem:[#allocation5 + $0xa9c] sm:$0xff]
    %v493 = vld [vmem:[#allocation5 + $0xaa4] sm:$0xff]
    %v494 = vld [vmem:[#allocation5 + $0xaac] sm:$0xff]
    %v495 = vld [vmem:[#allocation5 + $0xab4] sm:$0xf]
    %v496 = vld [vmem:[#allocation7] sm:$0x7f]
    %v498 = vlaneseq
    %v499 = vshrl.u32 %v498, 7
    %v500 = vsub.s32 0, %v499
    %v501 = vrot.slane %v496, %v500
    %v502 = vlaneseq
    %v503 = vshrl.u32 %v502, 7
    %v504 = vsub.s32 1, %v503
    %v505 = vrot.slane %v496, %v504
    %v506 = vlaneseq
    %v507 = vshrl.u32 %v506, 7
    %v508 = vsub.s32 2, %v507
    %v509 = vrot.slane %v496, %v508
    %v510 = vlaneseq
    %v511 = vshrl.u32 %v510, 7
    %v512 = vsub.s32 3, %v511
    %v513 = vrot.slane %v496, %v512
    %v514 = vlaneseq
    %v515 = vshrl.u32 %v514, 7
    %v516 = vsub.s32 4, %v515
    %v517 = vrot.slane %v496, %v516
    %v518 = vlaneseq
    %v519 = vshrl.u32 %v518, 7
    %v520 = vsub.s32 5, %v519
    %v521 = vrot.slane %v496, %v520
    %v522 = vlaneseq
    %v523 = vshrl.u32 %v522, 7
    %v524 = vsub.s32 6, %v523
    %v525 = vrot.slane %v496, %v524
    %v925 = vunpack.c.l.b16 %v104
    %v926 = vunpack.c.h.b16 %v104
    %v927 = vunpack.c.l.b16 %v105
    %v928 = vunpack.c.h.b16 %v105
    %v929 = vunpack.c.l.b16 %v106
    %v930 = vunpack.c.h.b16 %v106
    %v931 = vunpack.c.l.b16 %v107
    %v932 = vunpack.c.l.b16 %v108
    %v933 = vunpack.c.h.b16 %v108
    %v934 = vunpack.c.l.b16 %v109
    %v935 = vunpack.c.h.b16 %v109
    %v936 = vunpack.c.l.b16 %v110
    %v937 = vunpack.c.h.b16 %v110
    %v938 = vunpack.c.l.b16 %v111
    %v939 = vunpack.c.l.b16 %v112
    %v940 = vunpack.c.h.b16 %v112
    %v941 = vunpack.c.l.b16 %v113
    %v942 = vunpack.c.h.b16 %v113
    %v943 = vunpack.c.l.b16 %v114
    %v944 = vunpack.c.h.b16 %v114
    %v945 = vunpack.c.l.b16 %v115
    %v946 = vunpack.c.l.b16 %v116
    %v947 = vunpack.c.h.b16 %v116
    %v948 = vunpack.c.l.b16 %v117
    %v949 = vunpack.c.h.b16 %v117
    %v950 = vunpack.c.l.b16 %v118
    %v951 = vunpack.c.h.b16 %v118
    %v952 = vunpack.c.l.b16 %v119
    %v953 = vunpack.c.l.b16 %v120
    %v954 = vunpack.c.h.b16 %v120
    %v955 = vunpack.c.l.b16 %v121
    %v956 = vunpack.c.h.b16 %v121
    %v957 = vunpack.c.l.b16 %v122
    %v958 = vunpack.c.h.b16 %v122
    %v959 = vunpack.c.l.b16 %v123
    %v960 = vunpack.c.l.b16 %v124
    %v961 = vunpack.c.h.b16 %v124
    %v962 = vunpack.c.l.b16 %v125
    %v963 = vunpack.c.h.b16 %v125
    %v964 = vunpack.c.l.b16 %v126
    %v965 = vunpack.c.h.b16 %v126
    %v966 = vunpack.c.l.b16 %v127
    %v967 = vunpack.c.l.b16 %v128
    %v968 = vunpack.c.h.b16 %v128
    %v969 = vunpack.c.l.b16 %v129
    %v970 = vunpack.c.h.b16 %v129
    %v971 = vunpack.c.l.b16 %v130
    %v972 = vunpack.c.h.b16 %v130
    %v973 = vunpack.c.l.b16 %v131
    %v974 = vunpack.c.l.b16 %v132
    %v975 = vunpack.c.h.b16 %v132
    %v976 = vunpack.c.l.b16 %v133
    %v977 = vunpack.c.h.b16 %v133
    %v978 = vunpack.c.l.b16 %v134
    %v979 = vunpack.c.h.b16 %v134
    %v980 = vunpack.c.l.b16 %v135
    %v981 = vunpack.c.l.b16 %v136
    %v982 = vunpack.c.h.b16 %v136
    %v983 = vunpack.c.l.b16 %v137
    %v984 = vunpack.c.h.b16 %v137
    %v985 = vunpack.c.l.b16 %v138
    %v986 = vunpack.c.h.b16 %v138
    %v987 = vunpack.c.l.b16 %v139
    %v988 = vunpack.c.l.b16 %v140
    %v989 = vunpack.c.h.b16 %v140
    %v990 = vunpack.c.l.b16 %v141
    %v991 = vunpack.c.h.b16 %v141
    %v992 = vunpack.c.l.b16 %v142
    %v993 = vunpack.c.h.b16 %v142
    %v994 = vunpack.c.l.b16 %v143
    %v995 = vunpack.c.l.b16 %v144
    %v996 = vunpack.c.h.b16 %v144
    %v997 = vunpack.c.l.b16 %v145
    %v998 = vunpack.c.h.b16 %v145
    %v999 = vunpack.c.l.b16 %v146
    %v1000 = vunpack.c.h.b16 %v146
    %v1001 = vunpack.c.l.b16 %v147
    %v1002 = vunpack.c.l.b16 %v148
    %v1003 = vunpack.c.h.b16 %v148
    %v1004 = vunpack.c.l.b16 %v149
    %v1005 = vunpack.c.h.b16 %v149
    %v1006 = vunpack.c.l.b16 %v150
    %v1007 = vunpack.c.h.b16 %v150
    %v1008 = vunpack.c.l.b16 %v151
    %v1009 = vunpack.c.l.b16 %v152
    %v1010 = vunpack.c.h.b16 %v152
    %v1011 = vunpack.c.l.b16 %v153
    %v1012 = vunpack.c.h.b16 %v153
    %v1013 = vunpack.c.l.b16 %v154
    %v1014 = vunpack.c.h.b16 %v154
    %v1015 = vunpack.c.l.b16 %v155
    %v1016 = vunpack.c.l.b16 %v156
    %v1017 = vunpack.c.h.b16 %v156
    %v1018 = vunpack.c.l.b16 %v157
    %v1019 = vunpack.c.h.b16 %v157
    %v1020 = vunpack.c.l.b16 %v158
    %v1021 = vunpack.c.h.b16 %v158
    %v1022 = vunpack.c.l.b16 %v159
    %v1023 = vunpack.c.l.b16 %v160
    %v1024 = vunpack.c.h.b16 %v160
    %v1025 = vunpack.c.l.b16 %v161
    %v1026 = vunpack.c.h.b16 %v161
    %v1027 = vunpack.c.l.b16 %v162
    %v1028 = vunpack.c.h.b16 %v162
    %v1029 = vunpack.c.l.b16 %v163
    %v1030 = vunpack.c.l.b16 %v164
    %v1031 = vunpack.c.h.b16 %v164
    %v1032 = vunpack.c.l.b16 %v165
    %v1033 = vunpack.c.h.b16 %v165
    %v1034 = vunpack.c.l.b16 %v166
    %v1035 = vunpack.c.h.b16 %v166
    %v1036 = vunpack.c.l.b16 %v167
    %v1037 = vunpack.c.l.b16 %v168
    %v1038 = vunpack.c.h.b16 %v168
    %v1039 = vunpack.c.l.b16 %v169
    %v1040 = vunpack.c.h.b16 %v169
    %v1041 = vunpack.c.l.b16 %v170
    %v1042 = vunpack.c.h.b16 %v170
    %v1043 = vunpack.c.l.b16 %v171
    %v1044 = vunpack.c.l.b16 %v172
    %v1045 = vunpack.c.h.b16 %v172
    %v1046 = vunpack.c.l.b16 %v173
    %v1047 = vunpack.c.h.b16 %v173
    %v1048 = vunpack.c.l.b16 %v174
    %v1049 = vunpack.c.h.b16 %v174
    %v1050 = vunpack.c.l.b16 %v175
    %v1051 = vunpack.c.l.b16 %v176
    %v1052 = vunpack.c.h.b16 %v176
    %v1053 = vunpack.c.l.b16 %v177
    %v1054 = vunpack.c.h.b16 %v177
    %v1055 = vunpack.c.l.b16 %v178
    %v1056 = vunpack.c.h.b16 %v178
    %v1057 = vunpack.c.l.b16 %v179
    %v1058 = vunpack.c.l.b16 %v180
    %v1059 = vunpack.c.h.b16 %v180
    %v1060 = vunpack.c.l.b16 %v181
    %v1061 = vunpack.c.h.b16 %v181
    %v1062 = vunpack.c.l.b16 %v182
    %v1063 = vunpack.c.h.b16 %v182
    %v1064 = vunpack.c.l.b16 %v183
    %v1065 = vunpack.c.l.b16 %v184
    %v1066 = vunpack.c.h.b16 %v184
    %v1067 = vunpack.c.l.b16 %v185
    %v1068 = vunpack.c.h.b16 %v185
    %v1069 = vunpack.c.l.b16 %v186
    %v1070 = vunpack.c.h.b16 %v186
    %v1071 = vunpack.c.l.b16 %v187
    %v1072 = vunpack.c.l.b16 %v188
    %v1073 = vunpack.c.h.b16 %v188
    %v1074 = vunpack.c.l.b16 %v189
    %v1075 = vunpack.c.h.b16 %v189
    %v1076 = vunpack.c.l.b16 %v190
    %v1077 = vunpack.c.h.b16 %v190
    %v1078 = vunpack.c.l.b16 %v191
    %v1079 = vunpack.c.l.b16 %v192
    %v1080 = vunpack.c.h.b16 %v192
    %v1081 = vunpack.c.l.b16 %v193
    %v1082 = vunpack.c.h.b16 %v193
    %v1083 = vunpack.c.l.b16 %v194
    %v1084 = vunpack.c.h.b16 %v194
    %v1085 = vunpack.c.l.b16 %v195
    %v1086 = vunpack.c.l.b16 %v196
    %v1087 = vunpack.c.h.b16 %v196
    %v1088 = vunpack.c.l.b16 %v197
    %v1089 = vunpack.c.h.b16 %v197
    %v1090 = vunpack.c.l.b16 %v198
    %v1091 = vunpack.c.h.b16 %v198
    %v1092 = vunpack.c.l.b16 %v199
    %v1093 = vunpack.c.l.b16 %v200
    %v1094 = vunpack.c.h.b16 %v200
    %v1095 = vunpack.c.l.b16 %v201
    %v1096 = vunpack.c.h.b16 %v201
    %v1097 = vunpack.c.l.b16 %v202
    %v1098 = vunpack.c.h.b16 %v202
    %v1099 = vunpack.c.l.b16 %v203
    %v1100 = vunpack.c.l.b16 %v204
    %v1101 = vunpack.c.h.b16 %v204
    %v1102 = vunpack.c.l.b16 %v205
    %v1103 = vunpack.c.h.b16 %v205
    %v1104 = vunpack.c.l.b16 %v206
    %v1105 = vunpack.c.h.b16 %v206
    %v1106 = vunpack.c.l.b16 %v207
    %v1107 = vunpack.c.l.b16 %v208
    %v1108 = vunpack.c.h.b16 %v208
    %v1109 = vunpack.c.l.b16 %v209
    %v1110 = vunpack.c.h.b16 %v209
    %v1111 = vunpack.c.l.b16 %v210
    %v1112 = vunpack.c.h.b16 %v210
    %v1113 = vunpack.c.l.b16 %v211
    %v1114 = vunpack.c.l.b16 %v212
    %v1115 = vunpack.c.h.b16 %v212
    %v1116 = vunpack.c.l.b16 %v213
    %v1117 = vunpack.c.h.b16 %v213
    %v1118 = vunpack.c.l.b16 %v214
    %v1119 = vunpack.c.h.b16 %v214
    %v1120 = vunpack.c.l.b16 %v215
    %v1121 = vunpack.c.l.b16 %v216
    %v1122 = vunpack.c.h.b16 %v216
    %v1123 = vunpack.c.l.b16 %v217
    %v1124 = vunpack.c.h.b16 %v217
    %v1125 = vunpack.c.l.b16 %v218
    %v1126 = vunpack.c.h.b16 %v218
    %v1127 = vunpack.c.l.b16 %v219
    %v1128 = vunpack.c.l.b16 %v220
    %v1129 = vunpack.c.h.b16 %v220
    %v1130 = vunpack.c.l.b16 %v221
    %v1131 = vunpack.c.h.b16 %v221
    %v1132 = vunpack.c.l.b16 %v222
    %v1133 = vunpack.c.h.b16 %v222
    %v1134 = vunpack.c.l.b16 %v223
    %v1135 = vunpack.c.l.b16 %v224
    %v1136 = vunpack.c.h.b16 %v224
    %v1137 = vunpack.c.l.b16 %v225
    %v1138 = vunpack.c.h.b16 %v225
    %v1139 = vunpack.c.l.b16 %v226
    %v1140 = vunpack.c.h.b16 %v226
    %v1141 = vunpack.c.l.b16 %v227
    %v1142 = vunpack.c.l.b16 %v228
    %v1143 = vunpack.c.h.b16 %v228
    %v1144 = vunpack.c.l.b16 %v229
    %v1145 = vunpack.c.h.b16 %v229
    %v1146 = vunpack.c.l.b16 %v230
    %v1147 = vunpack.c.h.b16 %v230
    %v1148 = vunpack.c.l.b16 %v231
    %v1149 = vunpack.c.l.b16 %v232
    %v1150 = vunpack.c.h.b16 %v232
    %v1151 = vunpack.c.l.b16 %v233
    %v1152 = vunpack.c.h.b16 %v233
    %v1153 = vunpack.c.l.b16 %v234
    %v1154 = vunpack.c.h.b16 %v234
    %v1155 = vunpack.c.l.b16 %v235
    %v1156 = vunpack.c.l.b16 %v236
    %v1157 = vunpack.c.h.b16 %v236
    %v1158 = vunpack.c.l.b16 %v237
    %v1159 = vunpack.c.h.b16 %v237
    %v1160 = vunpack.c.l.b16 %v238
    %v1161 = vunpack.c.h.b16 %v238
    %v1162 = vunpack.c.l.b16 %v239
    %v1163 = vunpack.c.l.b16 %v240
    %v1164 = vunpack.c.h.b16 %v240
    %v1165 = vunpack.c.l.b16 %v241
    %v1166 = vunpack.c.h.b16 %v241
    %v1167 = vunpack.c.l.b16 %v242
    %v1168 = vunpack.c.h.b16 %v242
    %v1169 = vunpack.c.l.b16 %v243
    %v1170 = vunpack.c.l.b16 %v244
    %v1171 = vunpack.c.h.b16 %v244
    %v1172 = vunpack.c.l.b16 %v245
    %v1173 = vunpack.c.h.b16 %v245
    %v1174 = vunpack.c.l.b16 %v246
    %v1175 = vunpack.c.h.b16 %v246
    %v1176 = vunpack.c.l.b16 %v247
    %v1177 = vunpack.c.l.b16 %v248
    %v1178 = vunpack.c.h.b16 %v248
    %v1179 = vunpack.c.l.b16 %v249
    %v1180 = vunpack.c.h.b16 %v249
    %v1181 = vunpack.c.l.b16 %v250
    %v1182 = vunpack.c.h.b16 %v250
    %v1183 = vunpack.c.l.b16 %v251
    %v1184 = vunpack.c.l.b16 %v252
    %v1185 = vunpack.c.h.b16 %v252
    %v1186 = vunpack.c.l.b16 %v253
    %v1187 = vunpack.c.h.b16 %v253
    %v1188 = vunpack.c.l.b16 %v254
    %v1189 = vunpack.c.h.b16 %v254
    %v1190 = vunpack.c.l.b16 %v255
    %v1191 = vunpack.c.l.b16 %v256
    %v1192 = vunpack.c.h.b16 %v256
    %v1193 = vunpack.c.l.b16 %v257
    %v1194 = vunpack.c.h.b16 %v257
    %v1195 = vunpack.c.l.b16 %v258
    %v1196 = vunpack.c.h.b16 %v258
    %v1197 = vunpack.c.l.b16 %v259
    %v1198 = vunpack.c.l.b16 %v260
    %v1199 = vunpack.c.h.b16 %v260
    %v1200 = vunpack.c.l.b16 %v261
    %v1201 = vunpack.c.h.b16 %v261
    %v1202 = vunpack.c.l.b16 %v262
    %v1203 = vunpack.c.h.b16 %v262
    %v1204 = vunpack.c.l.b16 %v263
    %v1205 = vunpack.c.l.b16 %v264
    %v1206 = vunpack.c.h.b16 %v264
    %v1207 = vunpack.c.l.b16 %v265
    %v1208 = vunpack.c.h.b16 %v265
    %v1209 = vunpack.c.l.b16 %v266
    %v1210 = vunpack.c.h.b16 %v266
    %v1211 = vunpack.c.l.b16 %v267
    %v1212 = vunpack.c.l.b16 %v268
    %v1213 = vunpack.c.h.b16 %v268
    %v1214 = vunpack.c.l.b16 %v269
    %v1215 = vunpack.c.h.b16 %v269
    %v1216 = vunpack.c.l.b16 %v270
    %v1217 = vunpack.c.h.b16 %v270
    %v1218 = vunpack.c.l.b16 %v271
    %v1219 = vunpack.c.l.b16 %v272
    %v1220 = vunpack.c.h.b16 %v272
    %v1221 = vunpack.c.l.b16 %v273
    %v1222 = vunpack.c.h.b16 %v273
    %v1223 = vunpack.c.l.b16 %v274
    %v1224 = vunpack.c.h.b16 %v274
    %v1225 = vunpack.c.l.b16 %v275
    %v1226 = vunpack.c.l.b16 %v276
    %v1227 = vunpack.c.h.b16 %v276
    %v1228 = vunpack.c.l.b16 %v277
    %v1229 = vunpack.c.h.b16 %v277
    %v1230 = vunpack.c.l.b16 %v278
    %v1231 = vunpack.c.h.b16 %v278
    %v1232 = vunpack.c.l.b16 %v279
    %v1233 = vunpack.c.l.b16 %v280
    %v1234 = vunpack.c.h.b16 %v280
    %v1235 = vunpack.c.l.b16 %v281
    %v1236 = vunpack.c.h.b16 %v281
    %v1237 = vunpack.c.l.b16 %v282
    %v1238 = vunpack.c.h.b16 %v282
    %v1239 = vunpack.c.l.b16 %v283
    %v1240 = vunpack.c.l.b16 %v284
    %v1241 = vunpack.c.h.b16 %v284
    %v1242 = vunpack.c.l.b16 %v285
    %v1243 = vunpack.c.h.b16 %v285
    %v1244 = vunpack.c.l.b16 %v286
    %v1245 = vunpack.c.h.b16 %v286
    %v1246 = vunpack.c.l.b16 %v287
    %v1247 = vunpack.c.l.b16 %v288
    %v1248 = vunpack.c.h.b16 %v288
    %v1249 = vunpack.c.l.b16 %v289
    %v1250 = vunpack.c.h.b16 %v289
    %v1251 = vunpack.c.l.b16 %v290
    %v1252 = vunpack.c.h.b16 %v290
    %v1253 = vunpack.c.l.b16 %v291
    %v1254 = vunpack.c.l.b16 %v292
    %v1255 = vunpack.c.h.b16 %v292
    %v1256 = vunpack.c.l.b16 %v293
    %v1257 = vunpack.c.h.b16 %v293
    %v1258 = vunpack.c.l.b16 %v294
    %v1259 = vunpack.c.h.b16 %v294
    %v1260 = vunpack.c.l.b16 %v295
    %v1261 = vunpack.c.l.b16 %v296
    %v1262 = vunpack.c.h.b16 %v296
    %v1263 = vunpack.c.l.b16 %v297
    %v1264 = vunpack.c.h.b16 %v297
    %v1265 = vunpack.c.l.b16 %v298
    %v1266 = vunpack.c.h.b16 %v298
    %v1267 = vunpack.c.l.b16 %v299
    %v1268 = vunpack.c.l.b16 %v300
    %v1269 = vunpack.c.h.b16 %v300
    %v1270 = vunpack.c.l.b16 %v301
    %v1271 = vunpack.c.h.b16 %v301
    %v1272 = vunpack.c.l.b16 %v302
    %v1273 = vunpack.c.h.b16 %v302
    %v1274 = vunpack.c.l.b16 %v303
    %v1275 = vunpack.c.l.b16 %v304
    %v1276 = vunpack.c.h.b16 %v304
    %v1277 = vunpack.c.l.b16 %v305
    %v1278 = vunpack.c.h.b16 %v305
    %v1279 = vunpack.c.l.b16 %v306
    %v1280 = vunpack.c.h.b16 %v306
    %v1281 = vunpack.c.l.b16 %v307
    %v1282 = vunpack.c.l.b16 %v308
    %v1283 = vunpack.c.h.b16 %v308
    %v1284 = vunpack.c.l.b16 %v309
    %v1285 = vunpack.c.h.b16 %v309
    %v1286 = vunpack.c.l.b16 %v310
    %v1287 = vunpack.c.h.b16 %v310
    %v1288 = vunpack.c.l.b16 %v311
    %v1289 = vunpack.c.l.b16 %v312
    %v1290 = vunpack.c.h.b16 %v312
    %v1291 = vunpack.c.l.b16 %v313
    %v1292 = vunpack.c.h.b16 %v313
    %v1293 = vunpack.c.l.b16 %v314
    %v1294 = vunpack.c.h.b16 %v314
    %v1295 = vunpack.c.l.b16 %v315
    %v1296 = vunpack.c.l.b16 %v316
    %v1297 = vunpack.c.h.b16 %v316
    %v1298 = vunpack.c.l.b16 %v317
    %v1299 = vunpack.c.h.b16 %v317
    %v1300 = vunpack.c.l.b16 %v318
    %v1301 = vunpack.c.h.b16 %v318
    %v1302 = vunpack.c.l.b16 %v319
    %v1303 = vunpack.c.l.b16 %v320
    %v1304 = vunpack.c.h.b16 %v320
    %v1305 = vunpack.c.l.b16 %v321
    %v1306 = vunpack.c.h.b16 %v321
    %v1307 = vunpack.c.l.b16 %v322
    %v1308 = vunpack.c.h.b16 %v322
    %v1309 = vunpack.c.l.b16 %v323
    %v1310 = vunpack.c.l.b16 %v324
    %v1311 = vunpack.c.h.b16 %v324
    %v1312 = vunpack.c.l.b16 %v325
    %v1313 = vunpack.c.h.b16 %v325
    %v1314 = vunpack.c.l.b16 %v326
    %v1315 = vunpack.c.h.b16 %v326
    %v1316 = vunpack.c.l.b16 %v327
    %v1317 = vunpack.c.l.b16 %v328
    %v1318 = vunpack.c.h.b16 %v328
    %v1319 = vunpack.c.l.b16 %v329
    %v1320 = vunpack.c.h.b16 %v329
    %v1321 = vunpack.c.l.b16 %v330
    %v1322 = vunpack.c.h.b16 %v330
    %v1323 = vunpack.c.l.b16 %v331
    %v1324 = vunpack.c.l.b16 %v332
    %v1325 = vunpack.c.h.b16 %v332
    %v1326 = vunpack.c.l.b16 %v333
    %v1327 = vunpack.c.h.b16 %v333
    %v1328 = vunpack.c.l.b16 %v334
    %v1329 = vunpack.c.h.b16 %v334
    %v1330 = vunpack.c.l.b16 %v335
    %v1331 = vunpack.c.l.b16 %v336
    %v1332 = vunpack.c.h.b16 %v336
    %v1333 = vunpack.c.l.b16 %v337
    %v1334 = vunpack.c.h.b16 %v337
    %v1335 = vunpack.c.l.b16 %v338
    %v1336 = vunpack.c.h.b16 %v338
    %v1337 = vunpack.c.l.b16 %v339
    %v1338 = vunpack.c.l.b16 %v340
    %v1339 = vunpack.c.h.b16 %v340
    %v1340 = vunpack.c.l.b16 %v341
    %v1341 = vunpack.c.h.b16 %v341
    %v1342 = vunpack.c.l.b16 %v342
    %v1343 = vunpack.c.h.b16 %v342
    %v1344 = vunpack.c.l.b16 %v343
    %v1345 = vunpack.c.l.b16 %v344
    %v1346 = vunpack.c.h.b16 %v344
    %v1347 = vunpack.c.l.b16 %v345
    %v1348 = vunpack.c.h.b16 %v345
    %v1349 = vunpack.c.l.b16 %v346
    %v1350 = vunpack.c.h.b16 %v346
    %v1351 = vunpack.c.l.b16 %v347
    %v1352 = vunpack.c.l.b16 %v348
    %v1353 = vunpack.c.h.b16 %v348
    %v1354 = vunpack.c.l.b16 %v349
    %v1355 = vunpack.c.h.b16 %v349
    %v1356 = vunpack.c.l.b16 %v350
    %v1357 = vunpack.c.h.b16 %v350
    %v1358 = vunpack.c.l.b16 %v351
    %v1359 = vunpack.c.l.b16 %v352
    %v1360 = vunpack.c.h.b16 %v352
    %v1361 = vunpack.c.l.b16 %v353
    %v1362 = vunpack.c.h.b16 %v353
    %v1363 = vunpack.c.l.b16 %v354
    %v1364 = vunpack.c.h.b16 %v354
    %v1365 = vunpack.c.l.b16 %v355
    %v1366 = vunpack.c.l.b16 %v356
    %v1367 = vunpack.c.h.b16 %v356
    %v1368 = vunpack.c.l.b16 %v357
    %v1369 = vunpack.c.h.b16 %v357
    %v1370 = vunpack.c.l.b16 %v358
    %v1371 = vunpack.c.h.b16 %v358
    %v1372 = vunpack.c.l.b16 %v359
    %v1373 = vunpack.c.l.b16 %v360
    %v1374 = vunpack.c.h.b16 %v360
    %v1375 = vunpack.c.l.b16 %v361
    %v1376 = vunpack.c.h.b16 %v361
    %v1377 = vunpack.c.l.b16 %v362
    %v1378 = vunpack.c.h.b16 %v362
    %v1379 = vunpack.c.l.b16 %v363
    %v1380 = vunpack.c.l.b16 %v364
    %v1381 = vunpack.c.h.b16 %v364
    %v1382 = vunpack.c.l.b16 %v365
    %v1383 = vunpack.c.h.b16 %v365
    %v1384 = vunpack.c.l.b16 %v366
    %v1385 = vunpack.c.h.b16 %v366
    %v1386 = vunpack.c.l.b16 %v367
    %v1387 = vunpack.c.l.b16 %v368
    %v1388 = vunpack.c.h.b16 %v368
    %v1389 = vunpack.c.l.b16 %v369
    %v1390 = vunpack.c.h.b16 %v369
    %v1391 = vunpack.c.l.b16 %v370
    %v1392 = vunpack.c.h.b16 %v370
    %v1393 = vunpack.c.l.b16 %v371
    %v1394 = vunpack.c.l.b16 %v372
    %v1395 = vunpack.c.h.b16 %v372
    %v1396 = vunpack.c.l.b16 %v373
    %v1397 = vunpack.c.h.b16 %v373
    %v1398 = vunpack.c.l.b16 %v374
    %v1399 = vunpack.c.h.b16 %v374
    %v1400 = vunpack.c.l.b16 %v375
    %v1401 = vunpack.c.l.b16 %v376
    %v1402 = vunpack.c.h.b16 %v376
    %v1403 = vunpack.c.l.b16 %v377
    %v1404 = vunpack.c.h.b16 %v377
    %v1405 = vunpack.c.l.b16 %v378
    %v1406 = vunpack.c.h.b16 %v378
    %v1407 = vunpack.c.l.b16 %v379
    %v1408 = vunpack.c.l.b16 %v380
    %v1409 = vunpack.c.h.b16 %v380
    %v1410 = vunpack.c.l.b16 %v381
    %v1411 = vunpack.c.h.b16 %v381
    %v1412 = vunpack.c.l.b16 %v382
    %v1413 = vunpack.c.h.b16 %v382
    %v1414 = vunpack.c.l.b16 %v383
    %v1415 = vunpack.c.l.b16 %v384
    %v1416 = vunpack.c.h.b16 %v384
    %v1417 = vunpack.c.l.b16 %v385
    %v1418 = vunpack.c.h.b16 %v385
    %v1419 = vunpack.c.l.b16 %v386
    %v1420 = vunpack.c.h.b16 %v386
    %v1421 = vunpack.c.l.b16 %v387
    %v1422 = vunpack.c.l.b16 %v388
    %v1423 = vunpack.c.h.b16 %v388
    %v1424 = vunpack.c.l.b16 %v389
    %v1425 = vunpack.c.h.b16 %v389
    %v1426 = vunpack.c.l.b16 %v390
    %v1427 = vunpack.c.h.b16 %v390
    %v1428 = vunpack.c.l.b16 %v391
    %v1429 = vunpack.c.l.b16 %v392
    %v1430 = vunpack.c.h.b16 %v392
    %v1431 = vunpack.c.l.b16 %v393
    %v1432 = vunpack.c.h.b16 %v393
    %v1433 = vunpack.c.l.b16 %v394
    %v1434 = vunpack.c.h.b16 %v394
    %v1435 = vunpack.c.l.b16 %v395
    %v1436 = vunpack.c.l.b16 %v396
    %v1437 = vunpack.c.h.b16 %v396
    %v1438 = vunpack.c.l.b16 %v397
    %v1439 = vunpack.c.h.b16 %v397
    %v1440 = vunpack.c.l.b16 %v398
    %v1441 = vunpack.c.h.b16 %v398
    %v1442 = vunpack.c.l.b16 %v399
    %v1443 = vunpack.c.l.b16 %v400
    %v1444 = vunpack.c.h.b16 %v400
    %v1445 = vunpack.c.l.b16 %v401
    %v1446 = vunpack.c.h.b16 %v401
    %v1447 = vunpack.c.l.b16 %v402
    %v1448 = vunpack.c.h.b16 %v402
    %v1449 = vunpack.c.l.b16 %v403
    %v1450 = vunpack.c.l.b16 %v404
    %v1451 = vunpack.c.h.b16 %v404
    %v1452 = vunpack.c.l.b16 %v405
    %v1453 = vunpack.c.h.b16 %v405
    %v1454 = vunpack.c.l.b16 %v406
    %v1455 = vunpack.c.h.b16 %v406
    %v1456 = vunpack.c.l.b16 %v407
    %v1457 = vunpack.c.l.b16 %v408
    %v1458 = vunpack.c.h.b16 %v408
    %v1459 = vunpack.c.l.b16 %v409
    %v1460 = vunpack.c.h.b16 %v409
    %v1461 = vunpack.c.l.b16 %v410
    %v1462 = vunpack.c.h.b16 %v410
    %v1463 = vunpack.c.l.b16 %v411
    %v1464 = vunpack.c.l.b16 %v412
    %v1465 = vunpack.c.h.b16 %v412
    %v1466 = vunpack.c.l.b16 %v413
    %v1467 = vunpack.c.h.b16 %v413
    %v1468 = vunpack.c.l.b16 %v414
    %v1469 = vunpack.c.h.b16 %v414
    %v1470 = vunpack.c.l.b16 %v415
    %v1471 = vunpack.c.l.b16 %v416
    %v1472 = vunpack.c.h.b16 %v416
    %v1473 = vunpack.c.l.b16 %v417
    %v1474 = vunpack.c.h.b16 %v417
    %v1475 = vunpack.c.l.b16 %v418
    %v1476 = vunpack.c.h.b16 %v418
    %v1477 = vunpack.c.l.b16 %v419
    %v1478 = vunpack.c.l.b16 %v420
    %v1479 = vunpack.c.h.b16 %v420
    %v1480 = vunpack.c.l.b16 %v421
    %v1481 = vunpack.c.h.b16 %v421
    %v1482 = vunpack.c.l.b16 %v422
    %v1483 = vunpack.c.h.b16 %v422
    %v1484 = vunpack.c.l.b16 %v423
    %v1485 = vunpack.c.l.b16 %v424
    %v1486 = vunpack.c.h.b16 %v424
    %v1487 = vunpack.c.l.b16 %v425
    %v1488 = vunpack.c.h.b16 %v425
    %v1489 = vunpack.c.l.b16 %v426
    %v1490 = vunpack.c.h.b16 %v426
    %v1491 = vunpack.c.l.b16 %v427
    %v1492 = vunpack.c.l.b16 %v428
    %v1493 = vunpack.c.h.b16 %v428
    %v1494 = vunpack.c.l.b16 %v429
    %v1495 = vunpack.c.h.b16 %v429
    %v1496 = vunpack.c.l.b16 %v430
    %v1497 = vunpack.c.h.b16 %v430
    %v1498 = vunpack.c.l.b16 %v431
    %v1499 = vunpack.c.l.b16 %v432
    %v1500 = vunpack.c.h.b16 %v432
    %v1501 = vunpack.c.l.b16 %v433
    %v1502 = vunpack.c.h.b16 %v433
    %v1503 = vunpack.c.l.b16 %v434
    %v1504 = vunpack.c.h.b16 %v434
    %v1505 = vunpack.c.l.b16 %v435
    %v1506 = vunpack.c.l.b16 %v436
    %v1507 = vunpack.c.h.b16 %v436
    %v1508 = vunpack.c.l.b16 %v437
    %v1509 = vunpack.c.h.b16 %v437
    %v1510 = vunpack.c.l.b16 %v438
    %v1511 = vunpack.c.h.b16 %v438
    %v1512 = vunpack.c.l.b16 %v439
    %v1513 = vunpack.c.l.b16 %v440
    %v1514 = vunpack.c.h.b16 %v440
    %v1515 = vunpack.c.l.b16 %v441
    %v1516 = vunpack.c.h.b16 %v441
    %v1517 = vunpack.c.l.b16 %v442
    %v1518 = vunpack.c.h.b16 %v442
    %v1519 = vunpack.c.l.b16 %v443
    %v1520 = vunpack.c.l.b16 %v444
    %v1521 = vunpack.c.h.b16 %v444
    %v1522 = vunpack.c.l.b16 %v445
    %v1523 = vunpack.c.h.b16 %v445
    %v1524 = vunpack.c.l.b16 %v446
    %v1525 = vunpack.c.h.b16 %v446
    %v1526 = vunpack.c.l.b16 %v447
    %v1527 = vunpack.c.l.b16 %v448
    %v1528 = vunpack.c.h.b16 %v448
    %v1529 = vunpack.c.l.b16 %v449
    %v1530 = vunpack.c.h.b16 %v449
    %v1531 = vunpack.c.l.b16 %v450
    %v1532 = vunpack.c.h.b16 %v450
    %v1533 = vunpack.c.l.b16 %v451
    %v1534 = vunpack.c.l.b16 %v452
    %v1535 = vunpack.c.h.b16 %v452
    %v1536 = vunpack.c.l.b16 %v453
    %v1537 = vunpack.c.h.b16 %v453
    %v1538 = vunpack.c.l.b16 %v454
    %v1539 = vunpack.c.h.b16 %v454
    %v1540 = vunpack.c.l.b16 %v455
    %v1541 = vunpack.c.l.b16 %v456
    %v1542 = vunpack.c.h.b16 %v456
    %v1543 = vunpack.c.l.b16 %v457
    %v1544 = vunpack.c.h.b16 %v457
    %v1545 = vunpack.c.l.b16 %v458
    %v1546 = vunpack.c.h.b16 %v458
    %v1547 = vunpack.c.l.b16 %v459
    %v1548 = vunpack.c.l.b16 %v460
    %v1549 = vunpack.c.h.b16 %v460
    %v1550 = vunpack.c.l.b16 %v461
    %v1551 = vunpack.c.h.b16 %v461
    %v1552 = vunpack.c.l.b16 %v462
    %v1553 = vunpack.c.h.b16 %v462
    %v1554 = vunpack.c.l.b16 %v463
    %v1555 = vunpack.c.l.b16 %v464
    %v1556 = vunpack.c.h.b16 %v464
    %v1557 = vunpack.c.l.b16 %v465
    %v1558 = vunpack.c.h.b16 %v465
    %v1559 = vunpack.c.l.b16 %v466
    %v1560 = vunpack.c.h.b16 %v466
    %v1561 = vunpack.c.l.b16 %v467
    %v1562 = vunpack.c.l.b16 %v468
    %v1563 = vunpack.c.h.b16 %v468
    %v1564 = vunpack.c.l.b16 %v469
    %v1565 = vunpack.c.h.b16 %v469
    %v1566 = vunpack.c.l.b16 %v470
    %v1567 = vunpack.c.h.b16 %v470
    %v1568 = vunpack.c.l.b16 %v471
    %v1569 = vunpack.c.l.b16 %v472
    %v1570 = vunpack.c.h.b16 %v472
    %v1571 = vunpack.c.l.b16 %v473
    %v1572 = vunpack.c.h.b16 %v473
    %v1573 = vunpack.c.l.b16 %v474
    %v1574 = vunpack.c.h.b16 %v474
    %v1575 = vunpack.c.l.b16 %v475
    %v1576 = vunpack.c.l.b16 %v476
    %v1577 = vunpack.c.h.b16 %v476
    %v1578 = vunpack.c.l.b16 %v477
    %v1579 = vunpack.c.h.b16 %v477
    %v1580 = vunpack.c.l.b16 %v478
    %v1581 = vunpack.c.h.b16 %v478
    %v1582 = vunpack.c.l.b16 %v479
    %v1583 = vunpack.c.l.b16 %v480
    %v1584 = vunpack.c.h.b16 %v480
    %v1585 = vunpack.c.l.b16 %v481
    %v1586 = vunpack.c.h.b16 %v481
    %v1587 = vunpack.c.l.b16 %v482
    %v1588 = vunpack.c.h.b16 %v482
    %v1589 = vunpack.c.l.b16 %v483
    %v1590 = vunpack.c.l.b16 %v484
    %v1591 = vunpack.c.h.b16 %v484
    %v1592 = vunpack.c.l.b16 %v485
    %v1593 = vunpack.c.h.b16 %v485
    %v1594 = vunpack.c.l.b16 %v486
    %v1595 = vunpack.c.h.b16 %v486
    %v1596 = vunpack.c.l.b16 %v487
    %v1597 = vunpack.c.l.b16 %v488
    %v1598 = vunpack.c.h.b16 %v488
    %v1599 = vunpack.c.l.b16 %v489
    %v1600 = vunpack.c.h.b16 %v489
    %v1601 = vunpack.c.l.b16 %v490
    %v1602 = vunpack.c.h.b16 %v490
    %v1603 = vunpack.c.l.b16 %v491
    %v1604 = vunpack.c.l.b16 %v492
    %v1605 = vunpack.c.h.b16 %v492
    %v1606 = vunpack.c.l.b16 %v493
    %v1607 = vunpack.c.h.b16 %v493
    %v1608 = vunpack.c.l.b16 %v494
    %v1609 = vunpack.c.h.b16 %v494
    %v1610 = vunpack.c.l.b16 %v495
    %v1611 = vpack.c.b16 %v932, %v925
    %v1612 = vpack.c.b16 %v933, %v926
    %v1613 = vpack.c.b16 %v934, %v927
    %v1614 = vpack.c.b16 %v935, %v928
    %v1615 = vpack.c.b16 %v936, %v929
    %v1616 = vpack.c.b16 %v937, %v930
    %v1617 = vpack.c.b16 %v938, %v931
    %v1618 = vpack.c.b16 %v946, %v939
    %v1619 = vpack.c.b16 %v947, %v940
    %v1620 = vpack.c.b16 %v948, %v941
    %v1621 = vpack.c.b16 %v949, %v942
    %v1622 = vpack.c.b16 %v950, %v943
    %v1623 = vpack.c.b16 %v951, %v944
    %v1624 = vpack.c.b16 %v952, %v945
    %v1625 = vpack.c.b16 %v960, %v953
    %v1626 = vpack.c.b16 %v961, %v954
    %v1627 = vpack.c.b16 %v962, %v955
    %v1628 = vpack.c.b16 %v963, %v956
    %v1629 = vpack.c.b16 %v964, %v957
    %v1630 = vpack.c.b16 %v965, %v958
    %v1631 = vpack.c.b16 %v966, %v959
    %v1632 = vpack.c.b16 %v974, %v967
    %v1633 = vpack.c.b16 %v975, %v968
    %v1634 = vpack.c.b16 %v976, %v969
    %v1635 = vpack.c.b16 %v977, %v970
    %v1636 = vpack.c.b16 %v978, %v971
    %v1637 = vpack.c.b16 %v979, %v972
    %v1638 = vpack.c.b16 %v980, %v973
    %v1639 = vpack.c.b16 %v988, %v981
    %v1640 = vpack.c.b16 %v989, %v982
    %v1641 = vpack.c.b16 %v990, %v983
    %v1642 = vpack.c.b16 %v991, %v984
    %v1643 = vpack.c.b16 %v992, %v985
    %v1644 = vpack.c.b16 %v993, %v986
    %v1645 = vpack.c.b16 %v994, %v987
    %v1646 = vpack.c.b16 %v1002, %v995
    %v1647 = vpack.c.b16 %v1003, %v996
    %v1648 = vpack.c.b16 %v1004, %v997
    %v1649 = vpack.c.b16 %v1005, %v998
    %v1650 = vpack.c.b16 %v1006, %v999
    %v1651 = vpack.c.b16 %v1007, %v1000
    %v1652 = vpack.c.b16 %v1008, %v1001
    %v1653 = vpack.c.b16 %v1016, %v1009
    %v1654 = vpack.c.b16 %v1017, %v1010
    %v1655 = vpack.c.b16 %v1018, %v1011
    %v1656 = vpack.c.b16 %v1019, %v1012
    %v1657 = vpack.c.b16 %v1020, %v1013
    %v1658 = vpack.c.b16 %v1021, %v1014
    %v1659 = vpack.c.b16 %v1022, %v1015
    %v1660 = vpack.c.b16 %v1030, %v1023
    %v1661 = vpack.c.b16 %v1031, %v1024
    %v1662 = vpack.c.b16 %v1032, %v1025
    %v1663 = vpack.c.b16 %v1033, %v1026
    %v1664 = vpack.c.b16 %v1034, %v1027
    %v1665 = vpack.c.b16 %v1035, %v1028
    %v1666 = vpack.c.b16 %v1036, %v1029
    %v1667 = vpack.c.b16 %v1044, %v1037
    %v1668 = vpack.c.b16 %v1045, %v1038
    %v1669 = vpack.c.b16 %v1046, %v1039
    %v1670 = vpack.c.b16 %v1047, %v1040
    %v1671 = vpack.c.b16 %v1048, %v1041
    %v1672 = vpack.c.b16 %v1049, %v1042
    %v1673 = vpack.c.b16 %v1050, %v1043
    %v1674 = vpack.c.b16 %v1058, %v1051
    %v1675 = vpack.c.b16 %v1059, %v1052
    %v1676 = vpack.c.b16 %v1060, %v1053
    %v1677 = vpack.c.b16 %v1061, %v1054
    %v1678 = vpack.c.b16 %v1062, %v1055
    %v1679 = vpack.c.b16 %v1063, %v1056
    %v1680 = vpack.c.b16 %v1064, %v1057
    %v1681 = vpack.c.b16 %v1072, %v1065
    %v1682 = vpack.c.b16 %v1073, %v1066
    %v1683 = vpack.c.b16 %v1074, %v1067
    %v1684 = vpack.c.b16 %v1075, %v1068
    %v1685 = vpack.c.b16 %v1076, %v1069
    %v1686 = vpack.c.b16 %v1077, %v1070
    %v1687 = vpack.c.b16 %v1078, %v1071
    %v1688 = vpack.c.b16 %v1086, %v1079
    %v1689 = vpack.c.b16 %v1087, %v1080
    %v1690 = vpack.c.b16 %v1088, %v1081
    %v1691 = vpack.c.b16 %v1089, %v1082
    %v1692 = vpack.c.b16 %v1090, %v1083
    %v1693 = vpack.c.b16 %v1091, %v1084
    %v1694 = vpack.c.b16 %v1092, %v1085
    %v1695 = vpack.c.b16 %v1100, %v1093
    %v1696 = vpack.c.b16 %v1101, %v1094
    %v1697 = vpack.c.b16 %v1102, %v1095
    %v1698 = vpack.c.b16 %v1103, %v1096
    %v1699 = vpack.c.b16 %v1104, %v1097
    %v1700 = vpack.c.b16 %v1105, %v1098
    %v1701 = vpack.c.b16 %v1106, %v1099
    %v1702 = vpack.c.b16 %v1114, %v1107
    %v1703 = vpack.c.b16 %v1115, %v1108
    %v1704 = vpack.c.b16 %v1116, %v1109
    %v1705 = vpack.c.b16 %v1117, %v1110
    %v1706 = vpack.c.b16 %v1118, %v1111
    %v1707 = vpack.c.b16 %v1119, %v1112
    %v1708 = vpack.c.b16 %v1120, %v1113
    %v1709 = vpack.c.b16 %v1128, %v1121
    %v1710 = vpack.c.b16 %v1129, %v1122
    %v1711 = vpack.c.b16 %v1130, %v1123
    %v1712 = vpack.c.b16 %v1131, %v1124
    %v1713 = vpack.c.b16 %v1132, %v1125
    %v1714 = vpack.c.b16 %v1133, %v1126
    %v1715 = vpack.c.b16 %v1134, %v1127
    %v1716 = vpack.c.b16 %v1142, %v1135
    %v1717 = vpack.c.b16 %v1143, %v1136
    %v1718 = vpack.c.b16 %v1144, %v1137
    %v1719 = vpack.c.b16 %v1145, %v1138
    %v1720 = vpack.c.b16 %v1146, %v1139
    %v1721 = vpack.c.b16 %v1147, %v1140
    %v1722 = vpack.c.b16 %v1148, %v1141
    %v1723 = vpack.c.b16 %v1156, %v1149
    %v1724 = vpack.c.b16 %v1157, %v1150
    %v1725 = vpack.c.b16 %v1158, %v1151
    %v1726 = vpack.c.b16 %v1159, %v1152
    %v1727 = vpack.c.b16 %v1160, %v1153
    %v1728 = vpack.c.b16 %v1161, %v1154
    %v1729 = vpack.c.b16 %v1162, %v1155
    %v1730 = vpack.c.b16 %v1170, %v1163
    %v1731 = vpack.c.b16 %v1171, %v1164
    %v1732 = vpack.c.b16 %v1172, %v1165
    %v1733 = vpack.c.b16 %v1173, %v1166
    %v1734 = vpack.c.b16 %v1174, %v1167
    %v1735 = vpack.c.b16 %v1175, %v1168
    %v1736 = vpack.c.b16 %v1176, %v1169
    %v1737 = vpack.c.b16 %v1184, %v1177
    %v1738 = vpack.c.b16 %v1185, %v1178
    %v1739 = vpack.c.b16 %v1186, %v1179
    %v1740 = vpack.c.b16 %v1187, %v1180
    %v1741 = vpack.c.b16 %v1188, %v1181
    %v1742 = vpack.c.b16 %v1189, %v1182
    %v1743 = vpack.c.b16 %v1190, %v1183
    %v1744 = vpack.c.b16 %v1198, %v1191
    %v1745 = vpack.c.b16 %v1199, %v1192
    %v1746 = vpack.c.b16 %v1200, %v1193
    %v1747 = vpack.c.b16 %v1201, %v1194
    %v1748 = vpack.c.b16 %v1202, %v1195
    %v1749 = vpack.c.b16 %v1203, %v1196
    %v1750 = vpack.c.b16 %v1204, %v1197
    %v1751 = vpack.c.b16 %v1212, %v1205
    %v1752 = vpack.c.b16 %v1213, %v1206
    %v1753 = vpack.c.b16 %v1214, %v1207
    %v1754 = vpack.c.b16 %v1215, %v1208
    %v1755 = vpack.c.b16 %v1216, %v1209
    %v1756 = vpack.c.b16 %v1217, %v1210
    %v1757 = vpack.c.b16 %v1218, %v1211
    %v1758 = vpack.c.b16 %v1226, %v1219
    %v1759 = vpack.c.b16 %v1227, %v1220
    %v1760 = vpack.c.b16 %v1228, %v1221
    %v1761 = vpack.c.b16 %v1229, %v1222
    %v1762 = vpack.c.b16 %v1230, %v1223
    %v1763 = vpack.c.b16 %v1231, %v1224
    %v1764 = vpack.c.b16 %v1232, %v1225
    %v1765 = vpack.c.b16 %v1240, %v1233
    %v1766 = vpack.c.b16 %v1241, %v1234
    %v1767 = vpack.c.b16 %v1242, %v1235
    %v1768 = vpack.c.b16 %v1243, %v1236
    %v1769 = vpack.c.b16 %v1244, %v1237
    %v1770 = vpack.c.b16 %v1245, %v1238
    %v1771 = vpack.c.b16 %v1246, %v1239
    %v1772 = vpack.c.b16 %v1254, %v1247
    %v1773 = vpack.c.b16 %v1255, %v1248
    %v1774 = vpack.c.b16 %v1256, %v1249
    %v1775 = vpack.c.b16 %v1257, %v1250
    %v1776 = vpack.c.b16 %v1258, %v1251
    %v1777 = vpack.c.b16 %v1259, %v1252
    %v1778 = vpack.c.b16 %v1260, %v1253
    %v1779 = vpack.c.b16 %v1268, %v1261
    %v1780 = vpack.c.b16 %v1269, %v1262
    %v1781 = vpack.c.b16 %v1270, %v1263
    %v1782 = vpack.c.b16 %v1271, %v1264
    %v1783 = vpack.c.b16 %v1272, %v1265
    %v1784 = vpack.c.b16 %v1273, %v1266
    %v1785 = vpack.c.b16 %v1274, %v1267
    %v1786 = vpack.c.b16 %v1282, %v1275
    %v1787 = vpack.c.b16 %v1283, %v1276
    %v1788 = vpack.c.b16 %v1284, %v1277
    %v1789 = vpack.c.b16 %v1285, %v1278
    %v1790 = vpack.c.b16 %v1286, %v1279
    %v1791 = vpack.c.b16 %v1287, %v1280
    %v1792 = vpack.c.b16 %v1288, %v1281
    %v1793 = vpack.c.b16 %v1296, %v1289
    %v1794 = vpack.c.b16 %v1297, %v1290
    %v1795 = vpack.c.b16 %v1298, %v1291
    %v1796 = vpack.c.b16 %v1299, %v1292
    %v1797 = vpack.c.b16 %v1300, %v1293
    %v1798 = vpack.c.b16 %v1301, %v1294
    %v1799 = vpack.c.b16 %v1302, %v1295
    %v1800 = vpack.c.b16 %v1310, %v1303
    %v1801 = vpack.c.b16 %v1311, %v1304
    %v1802 = vpack.c.b16 %v1312, %v1305
    %v1803 = vpack.c.b16 %v1313, %v1306
    %v1804 = vpack.c.b16 %v1314, %v1307
    %v1805 = vpack.c.b16 %v1315, %v1308
    %v1806 = vpack.c.b16 %v1316, %v1309
    %v1807 = vpack.c.b16 %v1324, %v1317
    %v1808 = vpack.c.b16 %v1325, %v1318
    %v1809 = vpack.c.b16 %v1326, %v1319
    %v1810 = vpack.c.b16 %v1327, %v1320
    %v1811 = vpack.c.b16 %v1328, %v1321
    %v1812 = vpack.c.b16 %v1329, %v1322
    %v1813 = vpack.c.b16 %v1330, %v1323
    %v1814 = vpack.c.b16 %v1338, %v1331
    %v1815 = vpack.c.b16 %v1339, %v1332
    %v1816 = vpack.c.b16 %v1340, %v1333
    %v1817 = vpack.c.b16 %v1341, %v1334
    %v1818 = vpack.c.b16 %v1342, %v1335
    %v1819 = vpack.c.b16 %v1343, %v1336
    %v1820 = vpack.c.b16 %v1344, %v1337
    %v1821 = vpack.c.b16 %v1352, %v1345
    %v1822 = vpack.c.b16 %v1353, %v1346
    %v1823 = vpack.c.b16 %v1354, %v1347
    %v1824 = vpack.c.b16 %v1355, %v1348
    %v1825 = vpack.c.b16 %v1356, %v1349
    %v1826 = vpack.c.b16 %v1357, %v1350
    %v1827 = vpack.c.b16 %v1358, %v1351
    %v1828 = vpack.c.b16 %v1366, %v1359
    %v1829 = vpack.c.b16 %v1367, %v1360
    %v1830 = vpack.c.b16 %v1368, %v1361
    %v1831 = vpack.c.b16 %v1369, %v1362
    %v1832 = vpack.c.b16 %v1370, %v1363
    %v1833 = vpack.c.b16 %v1371, %v1364
    %v1834 = vpack.c.b16 %v1372, %v1365
    %v1835 = vpack.c.b16 %v1380, %v1373
    %v1836 = vpack.c.b16 %v1381, %v1374
    %v1837 = vpack.c.b16 %v1382, %v1375
    %v1838 = vpack.c.b16 %v1383, %v1376
    %v1839 = vpack.c.b16 %v1384, %v1377
    %v1840 = vpack.c.b16 %v1385, %v1378
    %v1841 = vpack.c.b16 %v1386, %v1379
    %v1842 = vpack.c.b16 %v1394, %v1387
    %v1843 = vpack.c.b16 %v1395, %v1388
    %v1844 = vpack.c.b16 %v1396, %v1389
    %v1845 = vpack.c.b16 %v1397, %v1390
    %v1846 = vpack.c.b16 %v1398, %v1391
    %v1847 = vpack.c.b16 %v1399, %v1392
    %v1848 = vpack.c.b16 %v1400, %v1393
    %v1849 = vpack.c.b16 %v1408, %v1401
    %v1850 = vpack.c.b16 %v1409, %v1402
    %v1851 = vpack.c.b16 %v1410, %v1403
    %v1852 = vpack.c.b16 %v1411, %v1404
    %v1853 = vpack.c.b16 %v1412, %v1405
    %v1854 = vpack.c.b16 %v1413, %v1406
    %v1855 = vpack.c.b16 %v1414, %v1407
    %v1856 = vpack.c.b16 %v1422, %v1415
    %v1857 = vpack.c.b16 %v1423, %v1416
    %v1858 = vpack.c.b16 %v1424, %v1417
    %v1859 = vpack.c.b16 %v1425, %v1418
    %v1860 = vpack.c.b16 %v1426, %v1419
    %v1861 = vpack.c.b16 %v1427, %v1420
    %v1862 = vpack.c.b16 %v1428, %v1421
    %v1863 = vpack.c.b16 %v1436, %v1429
    %v1864 = vpack.c.b16 %v1437, %v1430
    %v1865 = vpack.c.b16 %v1438, %v1431
    %v1866 = vpack.c.b16 %v1439, %v1432
    %v1867 = vpack.c.b16 %v1440, %v1433
    %v1868 = vpack.c.b16 %v1441, %v1434
    %v1869 = vpack.c.b16 %v1442, %v1435
    %v1870 = vpack.c.b16 %v1450, %v1443
    %v1871 = vpack.c.b16 %v1451, %v1444
    %v1872 = vpack.c.b16 %v1452, %v1445
    %v1873 = vpack.c.b16 %v1453, %v1446
    %v1874 = vpack.c.b16 %v1454, %v1447
    %v1875 = vpack.c.b16 %v1455, %v1448
    %v1876 = vpack.c.b16 %v1456, %v1449
    %v1877 = vpack.c.b16 %v1464, %v1457
    %v1878 = vpack.c.b16 %v1465, %v1458
    %v1879 = vpack.c.b16 %v1466, %v1459
    %v1880 = vpack.c.b16 %v1467, %v1460
    %v1881 = vpack.c.b16 %v1468, %v1461
    %v1882 = vpack.c.b16 %v1469, %v1462
    %v1883 = vpack.c.b16 %v1470, %v1463
    %v1884 = vpack.c.b16 %v1478, %v1471
    %v1885 = vpack.c.b16 %v1479, %v1472
    %v1886 = vpack.c.b16 %v1480, %v1473
    %v1887 = vpack.c.b16 %v1481, %v1474
    %v1888 = vpack.c.b16 %v1482, %v1475
    %v1889 = vpack.c.b16 %v1483, %v1476
    %v1890 = vpack.c.b16 %v1484, %v1477
    %v1891 = vpack.c.b16 %v1492, %v1485
    %v1892 = vpack.c.b16 %v1493, %v1486
    %v1893 = vpack.c.b16 %v1494, %v1487
    %v1894 = vpack.c.b16 %v1495, %v1488
    %v1895 = vpack.c.b16 %v1496, %v1489
    %v1896 = vpack.c.b16 %v1497, %v1490
    %v1897 = vpack.c.b16 %v1498, %v1491
    %v1898 = vpack.c.b16 %v1506, %v1499
    %v1899 = vpack.c.b16 %v1507, %v1500
    %v1900 = vpack.c.b16 %v1508, %v1501
    %v1901 = vpack.c.b16 %v1509, %v1502
    %v1902 = vpack.c.b16 %v1510, %v1503
    %v1903 = vpack.c.b16 %v1511, %v1504
    %v1904 = vpack.c.b16 %v1512, %v1505
    %v1905 = vpack.c.b16 %v1520, %v1513
    %v1906 = vpack.c.b16 %v1521, %v1514
    %v1907 = vpack.c.b16 %v1522, %v1515
    %v1908 = vpack.c.b16 %v1523, %v1516
    %v1909 = vpack.c.b16 %v1524, %v1517
    %v1910 = vpack.c.b16 %v1525, %v1518
    %v1911 = vpack.c.b16 %v1526, %v1519
    %v1912 = vpack.c.b16 %v1534, %v1527
    %v1913 = vpack.c.b16 %v1535, %v1528
    %v1914 = vpack.c.b16 %v1536, %v1529
    %v1915 = vpack.c.b16 %v1537, %v1530
    %v1916 = vpack.c.b16 %v1538, %v1531
    %v1917 = vpack.c.b16 %v1539, %v1532
    %v1918 = vpack.c.b16 %v1540, %v1533
    %v1919 = vpack.c.b16 %v1548, %v1541
    %v1920 = vpack.c.b16 %v1549, %v1542
    %v1921 = vpack.c.b16 %v1550, %v1543
    %v1922 = vpack.c.b16 %v1551, %v1544
    %v1923 = vpack.c.b16 %v1552, %v1545
    %v1924 = vpack.c.b16 %v1553, %v1546
    %v1925 = vpack.c.b16 %v1554, %v1547
    %v1926 = vpack.c.b16 %v1562, %v1555
    %v1927 = vpack.c.b16 %v1563, %v1556
    %v1928 = vpack.c.b16 %v1564, %v1557
    %v1929 = vpack.c.b16 %v1565, %v1558
    %v1930 = vpack.c.b16 %v1566, %v1559
    %v1931 = vpack.c.b16 %v1567, %v1560
    %v1932 = vpack.c.b16 %v1568, %v1561
    %v1933 = vpack.c.b16 %v1576, %v1569
    %v1934 = vpack.c.b16 %v1577, %v1570
    %v1935 = vpack.c.b16 %v1578, %v1571
    %v1936 = vpack.c.b16 %v1579, %v1572
    %v1937 = vpack.c.b16 %v1580, %v1573
    %v1938 = vpack.c.b16 %v1581, %v1574
    %v1939 = vpack.c.b16 %v1582, %v1575
    %v1940 = vpack.c.b16 %v1590, %v1583
    %v1941 = vpack.c.b16 %v1591, %v1584
    %v1942 = vpack.c.b16 %v1592, %v1585
    %v1943 = vpack.c.b16 %v1593, %v1586
    %v1944 = vpack.c.b16 %v1594, %v1587
    %v1945 = vpack.c.b16 %v1595, %v1588
    %v1946 = vpack.c.b16 %v1596, %v1589
    %v1947 = vpack.c.b16 %v1604, %v1597
    %v1948 = vpack.c.b16 %v1605, %v1598
    %v1949 = vpack.c.b16 %v1606, %v1599
    %v1950 = vpack.c.b16 %v1607, %v1600
    %v1951 = vpack.c.b16 %v1608, %v1601
    %v1952 = vpack.c.b16 %v1609, %v1602
    %v1953 = vpack.c.b16 %v1610, %v1603
    %vm2297 = vcmask 130048
    %v2299 = vsel %vm2297, %v103, 0
    %2301 = vmatprep.subr.bf16.mxu0 %v1661
    %2302 = vmatpush1.bf16.msra.mxu0 %v1660
    %2303 = vmatprep.subr.bf16.mxu0 %v1654
    %2304 = vmatpush1.bf16.msra.mxu0 %v1653
    %2305 = vmatprep.subr.bf16.mxu0 %v1647
    %2306 = vmatpush1.bf16.msra.mxu0 %v1646
    %2307 = vmatprep.subr.bf16.mxu0 %v1640
    %2308 = vmatpush1.bf16.msra.mxu0 %v1639
    %2309 = vmatprep.subr.bf16.mxu0 %v1633
    %2310 = vmatpush1.bf16.msra.mxu0 %v1632
    %2311 = vmatprep.subr.bf16.mxu0 %v1626
    %2312 = vmatpush1.bf16.msra.mxu0 %v1625
    %2313 = vmatprep.subr.bf16.mxu0 %v1619
    %2314 = vmatpush1.bf16.msra.mxu0 %v1618
    %2315 = vmatprep.subr.bf16.mxu0 %v1612
    %2316 = vmatpush1.bf16.msra.mxu0 %v1611
    %2317 = vmatprep.subr.bf16.mxu0 %v1717
    %2318 = vmatpush2.bf16.msra.mxu0 %v1716
    %2319 = vmatprep.subr.bf16.mxu0 %v1710
    %2320 = vmatpush2.bf16.msra.mxu0 %v1709
    %2321 = vmatprep.subr.bf16.mxu0 %v1703
    %2322 = vmatpush2.bf16.msra.mxu0 %v1702
    %2323 = vmatprep.subr.bf16.mxu0 %v1696
    %2324 = vmatpush2.bf16.msra.mxu0 %v1695
    %2325 = vmatprep.subr.bf16.mxu0 %v1689
    %2326 = vmatpush2.bf16.msra.mxu0 %v1688
    %2327 = vmatprep.subr.bf16.mxu0 %v1682
    %2328 = vmatpush2.bf16.msra.mxu0 %v1681
    %2329 = vmatprep.subr.bf16.mxu0 %v1675
    %2330 = vmatpush2.bf16.msra.mxu0 %v1674
    %2331 = vmatprep.subr.bf16.mxu0 %v1668
    %2332 = vmatpush2.bf16.msra.mxu0 %v1667
    %2333 = vmatprep.mubr.bf16.mxu0 %v98
    %2334 = vmatmul.mubr.bf16.gmra.mxu0 %v97
    %v2335 = vpop.f32.mrf.mxu0
    %v2336 = vadd.f32 %v501, %v2335
    %v2337 = vpop.f32.mrf.mxu0
    %v2338 = vadd.f32 %v505, %v2337
    %v2339 = vpop.f32.mrf.mxu0
    %v2340 = vpop.f32.mrf.mxu0
    %2341 = vdwg.mxu0
    %2342 = vmatprep.subr.bf16.mxu0 %v1773
    %2343 = vmatpush1.bf16.msra.mxu0 %v1772
    %2344 = vmatprep.subr.bf16.mxu0 %v1766
    %2345 = vmatpush1.bf16.msra.mxu0 %v1765
    %2346 = vmatprep.subr.bf16.mxu0 %v1759
    %2347 = vmatpush1.bf16.msra.mxu0 %v1758
    %2348 = vmatprep.subr.bf16.mxu0 %v1752
    %2349 = vmatpush1.bf16.msra.mxu0 %v1751
    %2350 = vmatprep.subr.bf16.mxu0 %v1745
    %2351 = vmatpush1.bf16.msra.mxu0 %v1744
    %2352 = vmatprep.subr.bf16.mxu0 %v1738
    %2353 = vmatpush1.bf16.msra.mxu0 %v1737
    %2354 = vmatprep.subr.bf16.mxu0 %v1731
    %2355 = vmatpush1.bf16.msra.mxu0 %v1730
    %2356 = vmatprep.subr.bf16.mxu0 %v1724
    %2357 = vmatpush1.bf16.msra.mxu0 %v1723
    %2358 = vmatprep.subr.bf16.mxu0 %v1829
    %2359 = vmatpush2.bf16.msra.mxu0 %v1828
    %2360 = vmatprep.subr.bf16.mxu0 %v1822
    %2361 = vmatpush2.bf16.msra.mxu0 %v1821
    %2362 = vmatprep.subr.bf16.mxu0 %v1815
    %2363 = vmatpush2.bf16.msra.mxu0 %v1814
    %2364 = vmatprep.subr.bf16.mxu0 %v1808
    %2365 = vmatpush2.bf16.msra.mxu0 %v1807
    %2366 = vmatprep.subr.bf16.mxu0 %v1801
    %2367 = vmatpush2.bf16.msra.mxu0 %v1800
    %2368 = vmatprep.subr.bf16.mxu0 %v1794
    %2369 = vmatpush2.bf16.msra.mxu0 %v1793
    %2370 = vmatprep.subr.bf16.mxu0 %v1787
    %2371 = vmatpush2.bf16.msra.mxu0 %v1786
    %2372 = vmatprep.subr.bf16.mxu0 %v1780
    %2373 = vmatpush2.bf16.msra.mxu0 %v1779
    %2374 = vmatprep.mubr.bf16.mxu0 %v100
    %2375 = vmatmul.mubr.bf16.gmra.mxu0 %v99
    %v2376 = vpop.f32.mrf.mxu0
    %v2377 = vadd.f32 %v2336, %v2376
    %v2378 = vpop.f32.mrf.mxu0
    %v2379 = vadd.f32 %v2338, %v2378
    %v2380 = vpop.f32.mrf.mxu0
    %v2381 = vpop.f32.mrf.mxu0
    %2382 = vdwg.mxu0
    %2383 = vmatprep.subr.bf16.mxu0 %v1885
    %2384 = vmatpush1.bf16.msra.mxu0 %v1884
    %2385 = vmatprep.subr.bf16.mxu0 %v1878
    %2386 = vmatpush1.bf16.msra.mxu0 %v1877
    %2387 = vmatprep.subr.bf16.mxu0 %v1871
    %2388 = vmatpush1.bf16.msra.mxu0 %v1870
    %2389 = vmatprep.subr.bf16.mxu0 %v1864
    %2390 = vmatpush1.bf16.msra.mxu0 %v1863
    %2391 = vmatprep.subr.bf16.mxu0 %v1857
    %2392 = vmatpush1.bf16.msra.mxu0 %v1856
    %2393 = vmatprep.subr.bf16.mxu0 %v1850
    %2394 = vmatpush1.bf16.msra.mxu0 %v1849
    %2395 = vmatprep.subr.bf16.mxu0 %v1843
    %2396 = vmatpush1.bf16.msra.mxu0 %v1842
    %2397 = vmatprep.subr.bf16.mxu0 %v1836
    %2398 = vmatpush1.bf16.msra.mxu0 %v1835
    %2399 = vmatprep.subr.bf16.mxu0 %v1941
    %2400 = vmatpush2.bf16.msra.mxu0 %v1940
    %2401 = vmatprep.subr.bf16.mxu0 %v1934
    %2402 = vmatpush2.bf16.msra.mxu0 %v1933
    %2403 = vmatprep.subr.bf16.mxu0 %v1927
    %2404 = vmatpush2.bf16.msra.mxu0 %v1926
    %2405 = vmatprep.subr.bf16.mxu0 %v1920
    %2406 = vmatpush2.bf16.msra.mxu0 %v1919
    %2407 = vmatprep.subr.bf16.mxu0 %v1913
    %2408 = vmatpush2.bf16.msra.mxu0 %v1912
    %2409 = vmatprep.subr.bf16.mxu0 %v1906
    %2410 = vmatpush2.bf16.msra.mxu0 %v1905
    %2411 = vmatprep.subr.bf16.mxu0 %v1899
    %2412 = vmatpush2.bf16.msra.mxu0 %v1898
    %2413 = vmatprep.subr.bf16.mxu0 %v1892
    %2414 = vmatpush2.bf16.msra.mxu0 %v1891
    %2415 = vmatprep.mubr.bf16.mxu0 %v102
    %2416 = vmatmul.mubr.bf16.gmra.mxu0 %v101
    %v2417 = vpop.f32.mrf.mxu0
    %v2418 = vadd.f32 %v2377, %v2417
    %v2419 = vpop.f32.mrf.mxu0
    %v2420 = vadd.f32 %v2379, %v2419
    %v2421 = vpop.f32.mrf.mxu0
    %v2422 = vpop.f32.mrf.mxu0
    %2423 = vdwg.mxu0
    %2424 = vmatprep.subr.bf16.mxu0 0
    %2425 = vmatpush1.bf16.msra.mxu0 0
    %2426 = vmatprep.subr.bf16.mxu0 0
    %2427 = vmatpush1.bf16.msra.mxu0 0
    %2428 = vmatprep.subr.bf16.mxu0 0
    %2429 = vmatpush1.bf16.msra.mxu0 0
    %2430 = vmatprep.subr.bf16.mxu0 0
    %2431 = vmatpush1.bf16.msra.mxu0 0
    %2432 = vmatprep.subr.bf16.mxu0 0
    %2433 = vmatpush1.bf16.msra.mxu0 0
    %2434 = vmatprep.subr.bf16.mxu0 0
    %2435 = vmatpush1.bf16.msra.mxu0 0
    %2436 = vmatprep.subr.bf16.mxu0 0
    %2437 = vmatpush1.bf16.msra.mxu0 0
    %2438 = vmatprep.subr.bf16.mxu0 %v1948
    %2439 = vmatpush1.bf16.msra.mxu0 %v1947
    %2440 = vmatprep.subr.bf16.mxu0 0
    %2441 = vmatpush2.bf16.msra.mxu0 0
    %2442 = vmatprep.subr.bf16.mxu0 0
    %2443 = vmatpush2.bf16.msra.mxu0 0
    %2444 = vmatprep.subr.bf16.mxu0 0
    %2445 = vmatpush2.bf16.msra.mxu0 0
    %2446 = vmatprep.subr.bf16.mxu0 0
    %2447 = vmatpush2.bf16.msra.mxu0 0
    %2448 = vmatprep.subr.bf16.mxu0 0
    %2449 = vmatpush2.bf16.msra.mxu0 0
    %2450 = vmatprep.subr.bf16.mxu0 0
    %2451 = vmatpush2.bf16.msra.mxu0 0
    %2452 = vmatprep.subr.bf16.mxu0 0
    %2453 = vmatpush2.bf16.msra.mxu0 0
    %2454 = vmatprep.subr.bf16.mxu0 0
    %2455 = vmatpush2.bf16.msra.mxu0 0
    %2456 = vmatprep.mubr.bf16.mxu0 0
    %2457 = vmatmul.mubr.bf16.gmra.mxu0 %v2299
    %v2458 = vpop.f32.mrf.mxu0
    %v2459 = vadd.f32 %v2418, %v2458
    %v2460 = vpop.f32.mrf.mxu0
    %v2461 = vadd.f32 %v2420, %v2460
    %v2462 = vpop.f32.mrf.mxu0
    %v2463 = vpop.f32.mrf.mxu0
    %2464 = vdwg.mxu0
    %2465 = vmatprep.subr.bf16.mxu0 %v1663
    %2466 = vmatpush1.bf16.msra.mxu0 %v1662
    %2467 = vmatprep.subr.bf16.mxu0 %v1656
    %2468 = vmatpush1.bf16.msra.mxu0 %v1655
    %2469 = vmatprep.subr.bf16.mxu0 %v1649
    %2470 = vmatpush1.bf16.msra.mxu0 %v1648
    %2471 = vmatprep.subr.bf16.mxu0 %v1642
    %2472 = vmatpush1.bf16.msra.mxu0 %v1641
    %2473 = vmatprep.subr.bf16.mxu0 %v1635
    %2474 = vmatpush1.bf16.msra.mxu0 %v1634
    %2475 = vmatprep.subr.bf16.mxu0 %v1628
    %2476 = vmatpush1.bf16.msra.mxu0 %v1627
    %2477 = vmatprep.subr.bf16.mxu0 %v1621
    %2478 = vmatpush1.bf16.msra.mxu0 %v1620
    %2479 = vmatprep.subr.bf16.mxu0 %v1614
    %2480 = vmatpush1.bf16.msra.mxu0 %v1613
    %2481 = vmatprep.subr.bf16.mxu0 %v1719
    %2482 = vmatpush2.bf16.msra.mxu0 %v1718
    %2483 = vmatprep.subr.bf16.mxu0 %v1712
    %2484 = vmatpush2.bf16.msra.mxu0 %v1711
    %2485 = vmatprep.subr.bf16.mxu0 %v1705
    %2486 = vmatpush2.bf16.msra.mxu0 %v1704
    %2487 = vmatprep.subr.bf16.mxu0 %v1698
    %2488 = vmatpush2.bf16.msra.mxu0 %v1697
    %2489 = vmatprep.subr.bf16.mxu0 %v1691
    %2490 = vmatpush2.bf16.msra.mxu0 %v1690
    %2491 = vmatprep.subr.bf16.mxu0 %v1684
    %2492 = vmatpush2.bf16.msra.mxu0 %v1683
    %2493 = vmatprep.subr.bf16.mxu0 %v1677
    %2494 = vmatpush2.bf16.msra.mxu0 %v1676
    %2495 = vmatprep.subr.bf16.mxu0 %v1670
    %2496 = vmatpush2.bf16.msra.mxu0 %v1669
    %2497 = vmatprep.mubr.bf16.mxu0 %v98
    %2498 = vmatmul.mubr.bf16.gmra.mxu0 %v97
    %v2499 = vpop.f32.mrf.mxu0
    %v2500 = vadd.f32 %v509, %v2499
    %v2501 = vpop.f32.mrf.mxu0
    %v2502 = vadd.f32 %v513, %v2501
    %v2503 = vpop.f32.mrf.mxu0
    %v2504 = vpop.f32.mrf.mxu0
    %2505 = vdwg.mxu0
    %2506 = vmatprep.subr.bf16.mxu0 %v1775
    %2507 = vmatpush1.bf16.msra.mxu0 %v1774
    %2508 = vmatprep.subr.bf16.mxu0 %v1768
    %2509 = vmatpush1.bf16.msra.mxu0 %v1767
    %2510 = vmatprep.subr.bf16.mxu0 %v1761
    %2511 = vmatpush1.bf16.msra.mxu0 %v1760
    %2512 = vmatprep.subr.bf16.mxu0 %v1754
    %2513 = vmatpush1.bf16.msra.mxu0 %v1753
    %2514 = vmatprep.subr.bf16.mxu0 %v1747
    %2515 = vmatpush1.bf16.msra.mxu0 %v1746
    %2516 = vmatprep.subr.bf16.mxu0 %v1740
    %2517 = vmatpush1.bf16.msra.mxu0 %v1739
    %2518 = vmatprep.subr.bf16.mxu0 %v1733
    %2519 = vmatpush1.bf16.msra.mxu0 %v1732
    %2520 = vmatprep.subr.bf16.mxu0 %v1726
    %2521 = vmatpush1.bf16.msra.mxu0 %v1725
    %2522 = vmatprep.subr.bf16.mxu0 %v1831
    %2523 = vmatpush2.bf16.msra.mxu0 %v1830
    %2524 = vmatprep.subr.bf16.mxu0 %v1824
    %2525 = vmatpush2.bf16.msra.mxu0 %v1823
    %2526 = vmatprep.subr.bf16.mxu0 %v1817
    %2527 = vmatpush2.bf16.msra.mxu0 %v1816
    %2528 = vmatprep.subr.bf16.mxu0 %v1810
    %2529 = vmatpush2.bf16.msra.mxu0 %v1809
    %2530 = vmatprep.subr.bf16.mxu0 %v1803
    %2531 = vmatpush2.bf16.msra.mxu0 %v1802
    %2532 = vmatprep.subr.bf16.mxu0 %v1796
    %2533 = vmatpush2.bf16.msra.mxu0 %v1795
    %2534 = vmatprep.subr.bf16.mxu0 %v1789
    %2535 = vmatpush2.bf16.msra.mxu0 %v1788
    %2536 = vmatprep.subr.bf16.mxu0 %v1782
    %2537 = vmatpush2.bf16.msra.mxu0 %v1781
    %2538 = vmatprep.mubr.bf16.mxu0 %v100
    %2539 = vmatmul.mubr.bf16.gmra.mxu0 %v99
    %v2540 = vpop.f32.mrf.mxu0
    %v2541 = vadd.f32 %v2500, %v2540
    %v2542 = vpop.f32.mrf.mxu0
    %v2543 = vadd.f32 %v2502, %v2542
    %v2544 = vpop.f32.mrf.mxu0
    %v2545 = vpop.f32.mrf.mxu0
    %2546 = vdwg.mxu0
    %2547 = vmatprep.subr.bf16.mxu0 %v1887
    %2548 = vmatpush1.bf16.msra.mxu0 %v1886
    %2549 = vmatprep.subr.bf16.mxu0 %v1880
    %2550 = vmatpush1.bf16.msra.mxu0 %v1879
    %2551 = vmatprep.subr.bf16.mxu0 %v1873
    %2552 = vmatpush1.bf16.msra.mxu0 %v1872
    %2553 = vmatprep.subr.bf16.mxu0 %v1866
    %2554 = vmatpush1.bf16.msra.mxu0 %v1865
    %2555 = vmatprep.subr.bf16.mxu0 %v1859
    %2556 = vmatpush1.bf16.msra.mxu0 %v1858
    %2557 = vmatprep.subr.bf16.mxu0 %v1852
    %2558 = vmatpush1.bf16.msra.mxu0 %v1851
    %2559 = vmatprep.subr.bf16.mxu0 %v1845
    %2560 = vmatpush1.bf16.msra.mxu0 %v1844
    %2561 = vmatprep.subr.bf16.mxu0 %v1838
    %2562 = vmatpush1.bf16.msra.mxu0 %v1837
    %2563 = vmatprep.subr.bf16.mxu0 %v1943
    %2564 = vmatpush2.bf16.msra.mxu0 %v1942
    %2565 = vmatprep.subr.bf16.mxu0 %v1936
    %2566 = vmatpush2.bf16.msra.mxu0 %v1935
    %2567 = vmatprep.subr.bf16.mxu0 %v1929
    %2568 = vmatpush2.bf16.msra.mxu0 %v1928
    %2569 = vmatprep.subr.bf16.mxu0 %v1922
    %2570 = vmatpush2.bf16.msra.mxu0 %v1921
    %2571 = vmatprep.subr.bf16.mxu0 %v1915
    %2572 = vmatpush2.bf16.msra.mxu0 %v1914
    %2573 = vmatprep.subr.bf16.mxu0 %v1908
    %2574 = vmatpush2.bf16.msra.mxu0 %v1907
    %2575 = vmatprep.subr.bf16.mxu0 %v1901
    %2576 = vmatpush2.bf16.msra.mxu0 %v1900
    %2577 = vmatprep.subr.bf16.mxu0 %v1894
    %2578 = vmatpush2.bf16.msra.mxu0 %v1893
    %2579 = vmatprep.mubr.bf16.mxu0 %v102
    %2580 = vmatmul.mubr.bf16.gmra.mxu0 %v101
    %v2581 = vpop.f32.mrf.mxu0
    %v2582 = vadd.f32 %v2541, %v2581
    %v2583 = vpop.f32.mrf.mxu0
    %v2584 = vadd.f32 %v2543, %v2583
    %v2585 = vpop.f32.mrf.mxu0
    %v2586 = vpop.f32.mrf.mxu0
    %2587 = vdwg.mxu0
    %2588 = vmatprep.subr.bf16.mxu0 0
    %2589 = vmatpush1.bf16.msra.mxu0 0
    %2590 = vmatprep.subr.bf16.mxu0 0
    %2591 = vmatpush1.bf16.msra.mxu0 0
    %2592 = vmatprep.subr.bf16.mxu0 0
    %2593 = vmatpush1.bf16.msra.mxu0 0
    %2594 = vmatprep.subr.bf16.mxu0 0
    %2595 = vmatpush1.bf16.msra.mxu0 0
    %2596 = vmatprep.subr.bf16.mxu0 0
    %2597 = vmatpush1.bf16.msra.mxu0 0
    %2598 = vmatprep.subr.bf16.mxu0 0
    %2599 = vmatpush1.bf16.msra.mxu0 0
    %2600 = vmatprep.subr.bf16.mxu0 0
    %2601 = vmatpush1.bf16.msra.mxu0 0
    %2602 = vmatprep.subr.bf16.mxu0 %v1950
    %2603 = vmatpush1.bf16.msra.mxu0 %v1949
    %2604 = vmatprep.subr.bf16.mxu0 0
    %2605 = vmatpush2.bf16.msra.mxu0 0
    %2606 = vmatprep.subr.bf16.mxu0 0
    %2607 = vmatpush2.bf16.msra.mxu0 0
    %2608 = vmatprep.subr.bf16.mxu0 0
    %2609 = vmatpush2.bf16.msra.mxu0 0
    %2610 = vmatprep.subr.bf16.mxu0 0
    %2611 = vmatpush2.bf16.msra.mxu0 0
    %2612 = vmatprep.subr.bf16.mxu0 0
    %2613 = vmatpush2.bf16.msra.mxu0 0
    %2614 = vmatprep.subr.bf16.mxu0 0
    %2615 = vmatpush2.bf16.msra.mxu0 0
    %2616 = vmatprep.subr.bf16.mxu0 0
    %2617 = vmatpush2.bf16.msra.mxu0 0
    %2618 = vmatprep.subr.bf16.mxu0 0
    %2619 = vmatpush2.bf16.msra.mxu0 0
    %2620 = vmatprep.mubr.bf16.mxu0 0
    %2621 = vmatmul.mubr.bf16.gmra.mxu0 %v2299
    %v2622 = vpop.f32.mrf.mxu0
    %v2623 = vadd.f32 %v2582, %v2622
    %v2624 = vpop.f32.mrf.mxu0
    %v2625 = vadd.f32 %v2584, %v2624
    %v2626 = vpop.f32.mrf.mxu0
    %v2627 = vpop.f32.mrf.mxu0
    %2628 = vdwg.mxu0
    %2629 = vmatprep.subr.bf16.mxu0 %v1665
    %2630 = vmatpush1.bf16.msra.mxu0 %v1664
    %2631 = vmatprep.subr.bf16.mxu0 %v1658
    %2632 = vmatpush1.bf16.msra.mxu0 %v1657
    %2633 = vmatprep.subr.bf16.mxu0 %v1651
    %2634 = vmatpush1.bf16.msra.mxu0 %v1650
    %2635 = vmatprep.subr.bf16.mxu0 %v1644
    %2636 = vmatpush1.bf16.msra.mxu0 %v1643
    %2637 = vmatprep.subr.bf16.mxu0 %v1637
    %2638 = vmatpush1.bf16.msra.mxu0 %v1636
    %2639 = vmatprep.subr.bf16.mxu0 %v1630
    %2640 = vmatpush1.bf16.msra.mxu0 %v1629
    %2641 = vmatprep.subr.bf16.mxu0 %v1623
    %2642 = vmatpush1.bf16.msra.mxu0 %v1622
    %2643 = vmatprep.subr.bf16.mxu0 %v1616
    %2644 = vmatpush1.bf16.msra.mxu0 %v1615
    %2645 = vmatprep.subr.bf16.mxu0 %v1721
    %2646 = vmatpush2.bf16.msra.mxu0 %v1720
    %2647 = vmatprep.subr.bf16.mxu0 %v1714
    %2648 = vmatpush2.bf16.msra.mxu0 %v1713
    %2649 = vmatprep.subr.bf16.mxu0 %v1707
    %2650 = vmatpush2.bf16.msra.mxu0 %v1706
    %2651 = vmatprep.subr.bf16.mxu0 %v1700
    %2652 = vmatpush2.bf16.msra.mxu0 %v1699
    %2653 = vmatprep.subr.bf16.mxu0 %v1693
    %2654 = vmatpush2.bf16.msra.mxu0 %v1692
    %2655 = vmatprep.subr.bf16.mxu0 %v1686
    %2656 = vmatpush2.bf16.msra.mxu0 %v1685
    %2657 = vmatprep.subr.bf16.mxu0 %v1679
    %2658 = vmatpush2.bf16.msra.mxu0 %v1678
    %2659 = vmatprep.subr.bf16.mxu0 %v1672
    %2660 = vmatpush2.bf16.msra.mxu0 %v1671
    %2661 = vmatprep.mubr.bf16.mxu0 %v98
    %2662 = vmatmul.mubr.bf16.gmra.mxu0 %v97
    %v2663 = vpop.f32.mrf.mxu0
    %v2664 = vadd.f32 %v517, %v2663
    %v2665 = vpop.f32.mrf.mxu0
    %v2666 = vadd.f32 %v521, %v2665
    %v2667 = vpop.f32.mrf.mxu0
    %v2668 = vpop.f32.mrf.mxu0
    %2669 = vdwg.mxu0
    %2670 = vmatprep.subr.bf16.mxu0 %v1777
    %2671 = vmatpush1.bf16.msra.mxu0 %v1776
    %2672 = vmatprep.subr.bf16.mxu0 %v1770
    %2673 = vmatpush1.bf16.msra.mxu0 %v1769
    %2674 = vmatprep.subr.bf16.mxu0 %v1763
    %2675 = vmatpush1.bf16.msra.mxu0 %v1762
    %2676 = vmatprep.subr.bf16.mxu0 %v1756
    %2677 = vmatpush1.bf16.msra.mxu0 %v1755
    %2678 = vmatprep.subr.bf16.mxu0 %v1749
    %2679 = vmatpush1.bf16.msra.mxu0 %v1748
    %2680 = vmatprep.subr.bf16.mxu0 %v1742
    %2681 = vmatpush1.bf16.msra.mxu0 %v1741
    %2682 = vmatprep.subr.bf16.mxu0 %v1735
    %2683 = vmatpush1.bf16.msra.mxu0 %v1734
    %2684 = vmatprep.subr.bf16.mxu0 %v1728
    %2685 = vmatpush1.bf16.msra.mxu0 %v1727
    %2686 = vmatprep.subr.bf16.mxu0 %v1833
    %2687 = vmatpush2.bf16.msra.mxu0 %v1832
    %2688 = vmatprep.subr.bf16.mxu0 %v1826
    %2689 = vmatpush2.bf16.msra.mxu0 %v1825
    %2690 = vmatprep.subr.bf16.mxu0 %v1819
    %2691 = vmatpush2.bf16.msra.mxu0 %v1818
    %2692 = vmatprep.subr.bf16.mxu0 %v1812
    %2693 = vmatpush2.bf16.msra.mxu0 %v1811
    %2694 = vmatprep.subr.bf16.mxu0 %v1805
    %2695 = vmatpush2.bf16.msra.mxu0 %v1804
    %2696 = vmatprep.subr.bf16.mxu0 %v1798
    %2697 = vmatpush2.bf16.msra.mxu0 %v1797
    %2698 = vmatprep.subr.bf16.mxu0 %v1791
    %2699 = vmatpush2.bf16.msra.mxu0 %v1790
    %2700 = vmatprep.subr.bf16.mxu0 %v1784
    %2701 = vmatpush2.bf16.msra.mxu0 %v1783
    %2702 = vmatprep.mubr.bf16.mxu0 %v100
    %2703 = vmatmul.mubr.bf16.gmra.mxu0 %v99
    %v2704 = vpop.f32.mrf.mxu0
    %v2705 = vadd.f32 %v2664, %v2704
    %v2706 = vpop.f32.mrf.mxu0
    %v2707 = vadd.f32 %v2666, %v2706
    %v2708 = vpop.f32.mrf.mxu0
    %v2709 = vpop.f32.mrf.mxu0
    %2710 = vdwg.mxu0
    %2711 = vmatprep.subr.bf16.mxu0 %v1889
    %2712 = vmatpush1.bf16.msra.mxu0 %v1888
    %2713 = vmatprep.subr.bf16.mxu0 %v1882
    %2714 = vmatpush1.bf16.msra.mxu0 %v1881
    %2715 = vmatprep.subr.bf16.mxu0 %v1875
    %2716 = vmatpush1.bf16.msra.mxu0 %v1874
    %2717 = vmatprep.subr.bf16.mxu0 %v1868
    %2718 = vmatpush1.bf16.msra.mxu0 %v1867
    %2719 = vmatprep.subr.bf16.mxu0 %v1861
    %2720 = vmatpush1.bf16.msra.mxu0 %v1860
    %2721 = vmatprep.subr.bf16.mxu0 %v1854
    %2722 = vmatpush1.bf16.msra.mxu0 %v1853
    %2723 = vmatprep.subr.bf16.mxu0 %v1847
    %2724 = vmatpush1.bf16.msra.mxu0 %v1846
    %2725 = vmatprep.subr.bf16.mxu0 %v1840
    %2726 = vmatpush1.bf16.msra.mxu0 %v1839
    %2727 = vmatprep.subr.bf16.mxu0 %v1945
    %2728 = vmatpush2.bf16.msra.mxu0 %v1944
    %2729 = vmatprep.subr.bf16.mxu0 %v1938
    %2730 = vmatpush2.bf16.msra.mxu0 %v1937
    %2731 = vmatprep.subr.bf16.mxu0 %v1931
    %2732 = vmatpush2.bf16.msra.mxu0 %v1930
    %2733 = vmatprep.subr.bf16.mxu0 %v1924
    %2734 = vmatpush2.bf16.msra.mxu0 %v1923
    %2735 = vmatprep.subr.bf16.mxu0 %v1917
    %2736 = vmatpush2.bf16.msra.mxu0 %v1916
    %2737 = vmatprep.subr.bf16.mxu0 %v1910
    %2738 = vmatpush2.bf16.msra.mxu0 %v1909
    %2739 = vmatprep.subr.bf16.mxu0 %v1903
    %2740 = vmatpush2.bf16.msra.mxu0 %v1902
    %2741 = vmatprep.subr.bf16.mxu0 %v1896
    %2742 = vmatpush2.bf16.msra.mxu0 %v1895
    %2743 = vmatprep.mubr.bf16.mxu0 %v102
    %2744 = vmatmul.mubr.bf16.gmra.mxu0 %v101
    %v2745 = vpop.f32.mrf.mxu0
    %v2746 = vadd.f32 %v2705, %v2745
    %v2747 = vpop.f32.mrf.mxu0
    %v2748 = vadd.f32 %v2707, %v2747
    %v2749 = vpop.f32.mrf.mxu0
    %v2750 = vpop.f32.mrf.mxu0
    %2751 = vdwg.mxu0
    %2752 = vmatprep.subr.bf16.mxu0 0
    %2753 = vmatpush1.bf16.msra.mxu0 0
    %2754 = vmatprep.subr.bf16.mxu0 0
    %2755 = vmatpush1.bf16.msra.mxu0 0
    %2756 = vmatprep.subr.bf16.mxu0 0
    %2757 = vmatpush1.bf16.msra.mxu0 0
    %2758 = vmatprep.subr.bf16.mxu0 0
    %2759 = vmatpush1.bf16.msra.mxu0 0
    %2760 = vmatprep.subr.bf16.mxu0 0
    %2761 = vmatpush1.bf16.msra.mxu0 0
    %2762 = vmatprep.subr.bf16.mxu0 0
    %2763 = vmatpush1.bf16.msra.mxu0 0
    %2764 = vmatprep.subr.bf16.mxu0 0
    %2765 = vmatpush1.bf16.msra.mxu0 0
    %2766 = vmatprep.subr.bf16.mxu0 %v1952
    %2767 = vmatpush1.bf16.msra.mxu0 %v1951
    %2768 = vmatprep.subr.bf16.mxu0 0
    %2769 = vmatpush2.bf16.msra.mxu0 0
    %2770 = vmatprep.subr.bf16.mxu0 0
    %2771 = vmatpush2.bf16.msra.mxu0 0
    %2772 = vmatprep.subr.bf16.mxu0 0
    %2773 = vmatpush2.bf16.msra.mxu0 0
    %2774 = vmatprep.subr.bf16.mxu0 0
    %2775 = vmatpush2.bf16.msra.mxu0 0
    %2776 = vmatprep.subr.bf16.mxu0 0
    %2777 = vmatpush2.bf16.msra.mxu0 0
    %2778 = vmatprep.subr.bf16.mxu0 0
    %2779 = vmatpush2.bf16.msra.mxu0 0
    %2780 = vmatprep.subr.bf16.mxu0 0
    %2781 = vmatpush2.bf16.msra.mxu0 0
    %2782 = vmatprep.subr.bf16.mxu0 0
    %2783 = vmatpush2.bf16.msra.mxu0 0
    %2784 = vmatprep.mubr.bf16.mxu0 0
    %2785 = vmatmul.mubr.bf16.gmra.mxu0 %v2299
    %v2786 = vpop.f32.mrf.mxu0
    %v2787 = vadd.f32 %v2746, %v2786
    %v2788 = vpop.f32.mrf.mxu0
    %v2789 = vadd.f32 %v2748, %v2788
    %v2790 = vpop.f32.mrf.mxu0
    %v2791 = vpop.f32.mrf.mxu0
    %2792 = vdwg.mxu0
    %2793 = vmatprep.subr.bf16.mxu0 0
    %2794 = vmatpush1.bf16.msra.mxu0 %v1666
    %2795 = vmatprep.subr.bf16.mxu0 0
    %2796 = vmatpush1.bf16.msra.mxu0 %v1659
    %2797 = vmatprep.subr.bf16.mxu0 0
    %2798 = vmatpush1.bf16.msra.mxu0 %v1652
    %2799 = vmatprep.subr.bf16.mxu0 0
    %2800 = vmatpush1.bf16.msra.mxu0 %v1645
    %2801 = vmatprep.subr.bf16.mxu0 0
    %2802 = vmatpush1.bf16.msra.mxu0 %v1638
    %2803 = vmatprep.subr.bf16.mxu0 0
    %2804 = vmatpush1.bf16.msra.mxu0 %v1631
    %2805 = vmatprep.subr.bf16.mxu0 0
    %2806 = vmatpush1.bf16.msra.mxu0 %v1624
    %2807 = vmatprep.subr.bf16.mxu0 0
    %2808 = vmatpush1.bf16.msra.mxu0 %v1617
    %2809 = vmatprep.subr.bf16.mxu0 0
    %2810 = vmatpush2.bf16.msra.mxu0 %v1722
    %2811 = vmatprep.subr.bf16.mxu0 0
    %2812 = vmatpush2.bf16.msra.mxu0 %v1715
    %2813 = vmatprep.subr.bf16.mxu0 0
    %2814 = vmatpush2.bf16.msra.mxu0 %v1708
    %2815 = vmatprep.subr.bf16.mxu0 0
    %2816 = vmatpush2.bf16.msra.mxu0 %v1701
    %2817 = vmatprep.subr.bf16.mxu0 0
    %2818 = vmatpush2.bf16.msra.mxu0 %v1694
    %2819 = vmatprep.subr.bf16.mxu0 0
    %2820 = vmatpush2.bf16.msra.mxu0 %v1687
    %2821 = vmatprep.subr.bf16.mxu0 0
    %2822 = vmatpush2.bf16.msra.mxu0 %v1680
    %2823 = vmatprep.subr.bf16.mxu0 0
    %2824 = vmatpush2.bf16.msra.mxu0 %v1673
    %2825 = vmatprep.mubr.bf16.mxu0 %v98
    %2826 = vmatmul.mubr.bf16.gmra.mxu0 %v97
    %v2827 = vpop.f32.mrf.mxu0
    %v2828 = vadd.f32 %v525, %v2827
    %v2829 = vpop.f32.mrf.mxu0
    %v2830 = vpop.f32.mrf.mxu0
    %v2831 = vpop.f32.mrf.mxu0
    %2832 = vdwg.mxu0
    %2833 = vmatprep.subr.bf16.mxu0 0
    %2834 = vmatpush1.bf16.msra.mxu0 %v1778
    %2835 = vmatprep.subr.bf16.mxu0 0
    %2836 = vmatpush1.bf16.msra.mxu0 %v1771
    %2837 = vmatprep.subr.bf16.mxu0 0
    %2838 = vmatpush1.bf16.msra.mxu0 %v1764
    %2839 = vmatprep.subr.bf16.mxu0 0
    %2840 = vmatpush1.bf16.msra.mxu0 %v1757
    %2841 = vmatprep.subr.bf16.mxu0 0
    %2842 = vmatpush1.bf16.msra.mxu0 %v1750
    %2843 = vmatprep.subr.bf16.mxu0 0
    %2844 = vmatpush1.bf16.msra.mxu0 %v1743
    %2845 = vmatprep.subr.bf16.mxu0 0
    %2846 = vmatpush1.bf16.msra.mxu0 %v1736
    %2847 = vmatprep.subr.bf16.mxu0 0
    %2848 = vmatpush1.bf16.msra.mxu0 %v1729
    %2849 = vmatprep.subr.bf16.mxu0 0
    %2850 = vmatpush2.bf16.msra.mxu0 %v1834
    %2851 = vmatprep.subr.bf16.mxu0 0
    %2852 = vmatpush2.bf16.msra.mxu0 %v1827
    %2853 = vmatprep.subr.bf16.mxu0 0
    %2854 = vmatpush2.bf16.msra.mxu0 %v1820
    %2855 = vmatprep.subr.bf16.mxu0 0
    %2856 = vmatpush2.bf16.msra.mxu0 %v1813
    %2857 = vmatprep.subr.bf16.mxu0 0
    %2858 = vmatpush2.bf16.msra.mxu0 %v1806
    %2859 = vmatprep.subr.bf16.mxu0 0
    %2860 = vmatpush2.bf16.msra.mxu0 %v1799
    %2861 = vmatprep.subr.bf16.mxu0 0
    %2862 = vmatpush2.bf16.msra.mxu0 %v1792
    %2863 = vmatprep.subr.bf16.mxu0 0
    %2864 = vmatpush2.bf16.msra.mxu0 %v1785
    %2865 = vmatprep.mubr.bf16.mxu0 %v100
    %2866 = vmatmul.mubr.bf16.gmra.mxu0 %v99
    %v2867 = vpop.f32.mrf.mxu0
    %v2868 = vadd.f32 %v2828, %v2867
    %v2869 = vpop.f32.mrf.mxu0
    %v2870 = vpop.f32.mrf.mxu0
    %v2871 = vpop.f32.mrf.mxu0
    %2872 = vdwg.mxu0
    %2873 = vmatprep.subr.bf16.mxu0 0
    %2874 = vmatpush1.bf16.msra.mxu0 %v1890
    %2875 = vmatprep.subr.bf16.mxu0 0
    %2876 = vmatpush1.bf16.msra.mxu0 %v1883
    %2877 = vmatprep.subr.bf16.mxu0 0
    %2878 = vmatpush1.bf16.msra.mxu0 %v1876
    %2879 = vmatprep.subr.bf16.mxu0 0
    %2880 = vmatpush1.bf16.msra.mxu0 %v1869
    %2881 = vmatprep.subr.bf16.mxu0 0
    %2882 = vmatpush1.bf16.msra.mxu0 %v1862
    %2883 = vmatprep.subr.bf16.mxu0 0
    %2884 = vmatpush1.bf16.msra.mxu0 %v1855
    %2885 = vmatprep.subr.bf16.mxu0 0
    %2886 = vmatpush1.bf16.msra.mxu0 %v1848
    %2887 = vmatprep.subr.bf16.mxu0 0
    %2888 = vmatpush1.bf16.msra.mxu0 %v1841
    %2889 = vmatprep.subr.bf16.mxu0 0
    %2890 = vmatpush2.bf16.msra.mxu0 %v1946
    %2891 = vmatprep.subr.bf16.mxu0 0
    %2892 = vmatpush2.bf16.msra.mxu0 %v1939
    %2893 = vmatprep.subr.bf16.mxu0 0
    %2894 = vmatpush2.bf16.msra.mxu0 %v1932
    %2895 = vmatprep.subr.bf16.mxu0 0
    %2896 = vmatpush2.bf16.msra.mxu0 %v1925
    %2897 = vmatprep.subr.bf16.mxu0 0
    %2898 = vmatpush2.bf16.msra.mxu0 %v1918
    %2899 = vmatprep.subr.bf16.mxu0 0
    %2900 = vmatpush2.bf16.msra.mxu0 %v1911
    %2901 = vmatprep.subr.bf16.mxu0 0
    %2902 = vmatpush2.bf16.msra.mxu0 %v1904
    %2903 = vmatprep.subr.bf16.mxu0 0
    %2904 = vmatpush2.bf16.msra.mxu0 %v1897
    %2905 = vmatprep.mubr.bf16.mxu0 %v102
    %2906 = vmatmul.mubr.bf16.gmra.mxu0 %v101
    %v2907 = vpop.f32.mrf.mxu0
    %v2908 = vadd.f32 %v2868, %v2907
    %v2909 = vpop.f32.mrf.mxu0
    %v2910 = vpop.f32.mrf.mxu0
    %v2911 = vpop.f32.mrf.mxu0
    %2912 = vdwg.mxu0
    %2913 = vmatprep.subr.bf16.mxu0 0
    %2914 = vmatpush1.bf16.msra.mxu0 0
    %2915 = vmatprep.subr.bf16.mxu0 0
    %2916 = vmatpush1.bf16.msra.mxu0 0
    %2917 = vmatprep.subr.bf16.mxu0 0
    %2918 = vmatpush1.bf16.msra.mxu0 0
    %2919 = vmatprep.subr.bf16.mxu0 0
    %2920 = vmatpush1.bf16.msra.mxu0 0
    %2921 = vmatprep.subr.bf16.mxu0 0
    %2922 = vmatpush1.bf16.msra.mxu0 0
    %2923 = vmatprep.subr.bf16.mxu0 0
    %2924 = vmatpush1.bf16.msra.mxu0 0
    %2925 = vmatprep.subr.bf16.mxu0 0
    %2926 = vmatpush1.bf16.msra.mxu0 0
    %2927 = vmatprep.subr.bf16.mxu0 0
    %2928 = vmatpush1.bf16.msra.mxu0 %v1953
    %2929 = vmatprep.subr.bf16.mxu0 0
    %2930 = vmatpush2.bf16.msra.mxu0 0
    %2931 = vmatprep.subr.bf16.mxu0 0
    %2932 = vmatpush2.bf16.msra.mxu0 0
    %2933 = vmatprep.subr.bf16.mxu0 0
    %2934 = vmatpush2.bf16.msra.mxu0 0
    %2935 = vmatprep.subr.bf16.mxu0 0
    %2936 = vmatpush2.bf16.msra.mxu0 0
    %2937 = vmatprep.subr.bf16.mxu0 0
    %2938 = vmatpush2.bf16.msra.mxu0 0
    %2939 = vmatprep.subr.bf16.mxu0 0
    %2940 = vmatpush2.bf16.msra.mxu0 0
    %2941 = vmatprep.subr.bf16.mxu0 0
    %2942 = vmatpush2.bf16.msra.mxu0 0
    %2943 = vmatprep.subr.bf16.mxu0 0
    %2944 = vmatpush2.bf16.msra.mxu0 0
    %2945 = vmatprep.mubr.bf16.mxu0 0
    %2946 = vmatmul.mubr.bf16.gmra.mxu0 %v2299
    %v2947 = vpop.f32.mrf.mxu0
    %v2948 = vadd.f32 %v2908, %v2947
    %v2949 = vpop.f32.mrf.mxu0
    %v2950 = vpop.f32.mrf.mxu0
    %v2951 = vpop.f32.mrf.mxu0
    %2952 = vdwg.mxu0
    %v2953 = vtanh.pop %v2459
    %v2954 = vtanh.pop %v2461
    %v2955 = vtanh.pop %v2623
    %v2956 = vtanh.pop %v2625
    %v2957 = vtanh.pop %v2787
    %v2958 = vtanh.pop %v2789
    %v2959 = vtanh.pop %v2948
    %v2967 = vcombine.low %v2953, %v2954
    %v2968 = vcombine.low %v2955, %v2956
    %v2970 = vunpack.c.l.s4 1983009808
    %v2971 = vunpack.c.0.s8 %v2970
    %v2972 = vlaneseq
    %v2973 = vshrl.u32 %v2972, 7
    %v2974 = vsub.s32 %v2971, %v2973
    %v2975 = vrot.slane %v2967, %v2974
    %v2977 = vunpack.c.l.s4 1983009808
    %v2978 = vunpack.c.0.s8 %v2977
    %v2979 = vlaneseq
    %v2980 = vshrl.u32 %v2979, 7
    %v2981 = vsub.s32 %v2978, %v2980
    %v2982 = vrot.slane %v2968, %v2981
    %v2983 = vcombine.low %v2975, %v2982
    %v2984 = vcombine.low %v2957, %v2958
    %v2986 = vunpack.c.l.s4 1983009808
    %v2987 = vunpack.c.0.s8 %v2986
    %v2988 = vlaneseq
    %v2989 = vshrl.u32 %v2988, 7
    %v2990 = vsub.s32 %v2987, %v2989
    %v2991 = vrot.slane %v2984, %v2990
    %v2993 = vunpack.c.l.s4 1983009808
    %v2994 = vunpack.c.0.s8 %v2993
    %v2995 = vlaneseq
    %v2996 = vshrl.u32 %v2995, 7
    %v2997 = vsub.s32 %v2994, %v2996
    %v2998 = vrot.slane %v2959, %v2997
    %v2999 = vcombine.low %v2991, %v2998
    %3002 = vst [vmem:[#allocation8] sm:$0xff] %v2983
    %vm3003 = vcmask 1041408
    %vm3004 = vcmask 1043458
    %vm3005 = vmor %vm3004, %vm3003
    %vm3006 = vcmask 128004
    %vm3007 = vmor %vm3006, %vm3005
    %3008 = vst.msk [vmem:[#allocation8 + $0x8] sm:$0x3f] %vm3007, %v2999
    // Predicated region
    $region26: #{tpu_custom_call.1} parent=1 // pred_check
      _
    $region27: #{tpu_custom_call.1} parent=1 // pred_check_branch
      %3010 = sbr.rel (0) target = $region29
    $region28: #{tpu_custom_call.1} parent=1 // pred_region
      %s3012 = ssub.s32 224, 224
      %3013 = vsyncadd [#allocation4], %s3012
      %s3015 = sshll.u32 [#allocation8], 4
      %s3016 = int_to_ptr.vmem [resolvable:$true] %s3015
      %3018 = dma.vmem_to_hbm [thread:$0]  %s3016, 224, %s3, [#allocation4]
    $region29: #{tpu_custom_call.1} parent=1 // pred_fallthru
      _
    // Predicated region
    $region30: #{tpu_custom_call.1} parent=1 // pred_check
      _
    $region31: #{tpu_custom_call.1} parent=1 // pred_check_branch
      %3020 = sbr.rel (0) target = $region33
    $region32: #{tpu_custom_call.1} parent=1 // pred_region
      %3021 = dma.done [#allocation4], 224
    $region33: #{tpu_custom_call.1} parent=1 // pred_fallthru
      _
    %3022 = vsyncpa [#allocation3], 1
    %3023 = vsyncpa [#allocation6], 1
    %3024 = vsyncpa [#allocation4], 1

</llo_original>
